<compile_context>
chip_gen: v7x
topology: tpu7x:2x2x1
jax: 0.10.0
libtpu: 0.0.40
codegen_flags: <defaults>
</compile_context>

<pallas_src>
import jax
import jax.numpy as jnp
from jax import lax
from jax.experimental import pallas as pl
from jax.experimental.pallas import tpu as pltpu

LN_EPS = 1e-5
LANE = 128
SUBLANE = 8
OUT_PAD = 128  # lane-dense output width; column 0 -> q1, column 1 -> q2


def _round_up(x, m):
    return ((x + m - 1) // m) * m


def _ln_tanh(y, gamma, beta, valid_f, f_pad):
    """LayerNorm (biased variance, eps=1e-5) + affine + tanh over the first
    `valid_f` lanes of `y`.  Padded lanes (gamma == beta == 0) come out 0."""
    if valid_f == f_pad:
        mu = jnp.mean(y, axis=-1, keepdims=True)
        d = y - mu
        var = jnp.mean(d * d, axis=-1, keepdims=True)
    else:
        mask = lax.broadcasted_iota(jnp.int32, y.shape, 1) < valid_f
        inv_f = 1.0 / float(valid_f)
        ym = jnp.where(mask, y, 0.0)
        mu = jnp.sum(ym, axis=-1, keepdims=True) * inv_f
        d = jnp.where(mask, y - mu, 0.0)
        var = jnp.sum(d * d, axis=-1, keepdims=True) * inv_f
    y_hat = (y - mu) * lax.rsqrt(var + LN_EPS)
    return jnp.tanh(y_hat * gamma + beta)


def _make_kernel(feature_dim, f_pad, compute_dtype):
    cdt = compute_dtype

    def kernel(obs_ref, vtw_ref, phy_ref, act_ref,
               vtb_ref, vg_ref, vbe_ref,
               itw_ref, itb_ref, ig_ref, ibe_ref,
               w1h_ref, w1a_ref, b1_ref, w2_ref, b2_ref, w3_ref, b3_ref,
               out_ref, acc_ref):
        k = pl.program_id(1)

        @pl.when(k == 0)
        def _init():
            acc_ref[...] = jnp.zeros_like(acc_ref)

        # Streamed, K-tiled vision-trunk matmul with a resident f32 accumulator.
        acc_ref[...] += jnp.dot(obs_ref[...], vtw_ref[...],
                                preferred_element_type=jnp.float32)

        @pl.when(k == pl.num_programs(1) - 1)
        def _finalize():
            # Vision trunk: bias + LayerNorm + Tanh.
            h_v = _ln_tanh(acc_ref[...] + vtb_ref[...],
                           vg_ref[...], vbe_ref[...], feature_dim, f_pad)
            # Inner-state trunk (small) done fully on the last K step.
            y_i = jnp.dot(phy_ref[...], itw_ref[...],
                          preferred_element_type=jnp.float32) + itb_ref[...]
            h_i = _ln_tanh(y_i, ig_ref[...], ibe_ref[...], feature_dim, f_pad)
            h = (h_v + h_i).astype(cdt)

            # Fused Q1/Q2 layer-1: concat([h, act]) @ W1 == h @ W1h + act @ W1a,
            # with both heads' output columns concatenated along lanes.
            z = (jnp.dot(h, w1h_ref[...], preferred_element_type=jnp.float32)
                 + jnp.dot(act_ref[...], w1a_ref[...],
                           preferred_element_type=jnp.float32)
                 + b1_ref[...])
            z = jnp.maximum(z, 0.0).astype(cdt)

            # Fused layer-2: block-diagonal [W2_q1, 0; 0, W2_q2].
            z = jnp.dot(z, w2_ref[...],
                        preferred_element_type=jnp.float32) + b2_ref[...]
            z = jnp.maximum(z, 0.0).astype(cdt)

            # Fused, lane-dense final layer: col 0 -> q1, col 1 -> q2, rest 0.
            out = jnp.dot(z, w3_ref[...],
                          preferred_element_type=jnp.float32) + b3_ref[...]
            out_ref[...] = out.astype(out_ref.dtype)

    return kernel


# ------------------------- parameter preparation ---------------------------

def prepare_params(params, *, feature_dim, action_dim, hidden_dim,
                   compute_dtype=jnp.float32, k_tile=512):
    """One-time padding / fusion of the PyTorch-layout parameters."""
    F, A, H = feature_dim, action_dim, hidden_dim
    Kv = params["v_trunk_w"].shape[0]
    Kp = params["i_trunk_w"].shape[0]

    F_pad = _round_up(F, LANE)
    A_pad = _round_up(A, LANE)
    H_pad = _round_up(H, LANE)
    H2 = 2 * H_pad
    TK = min(k_tile, _round_up(Kv, LANE))
    Kv_pad = _round_up(Kv, TK)
    Kp_pad = _round_up(Kp, LANE)

    cdt = compute_dtype
    f32 = jnp.float32

    def pad2(a, r, c, dt):
        out = jnp.zeros((r, c), dt)
        return out.at[: a.shape[0], : a.shape[1]].set(a.astype(dt))

    prep = dict(
        vtw=pad2(params["v_trunk_w"], Kv_pad, F_pad, cdt),
        vtb=pad2(params["v_trunk_b"], 1, F_pad, f32),
        vg=pad2(params["v_ln_g"], 1, F_pad, f32),
        vbe=pad2(params["v_ln_b"], 1, F_pad, f32),
        itw=pad2(params["i_trunk_w"], Kp_pad, F_pad, cdt),
        itb=pad2(params["i_trunk_b"], 1, F_pad, f32),
        ig=pad2(params["i_ln_g"], 1, F_pad, f32),
        ibe=pad2(params["i_ln_b"], 1, F_pad, f32),
    )

    # Fused Q-head weights. z lane layout: [0, H) -> Q1, [H_pad, H_pad+H) -> Q2.
    w1h = jnp.zeros((F_pad, H2), cdt)
    w1h = w1h.at[:F, :H].set(params["q1_w1"][:F].astype(cdt))
    w1h = w1h.at[:F, H_pad:H_pad + H].set(params["q2_w1"][:F].astype(cdt))
    w1a = jnp.zeros((A_pad, H2), cdt)
    w1a = w1a.at[:A, :H].set(params["q1_w1"][F:].astype(cdt))
    w1a = w1a.at[:A, H_pad:H_pad + H].set(params["q2_w1"][F:].astype(cdt))
    b1 = jnp.zeros((1, H2), f32)
    b1 = b1.at[:, :H].set(params["q1_b1"])
    b1 = b1.at[:, H_pad:H_pad + H].set(params["q2_b1"])

    # TODO(synk): at production hidden sizes (H ~ 1024) split this
    # block-diagonal layer-2 back into two per-head matmuls to avoid the
    # 2x zero-FLOP overhead; at small H the fused version fills lanes better.
    w2 = jnp.zeros((H2, H2), cdt)
    w2 = w2.at[:H, :H].set(params["q1_w2"].astype(cdt))
    w2 = w2.at[H_pad:H_pad + H, H_pad:H_pad + H].set(params["q2_w2"].astype(cdt))
    b2 = jnp.zeros((1, H2), f32)
    b2 = b2.at[:, :H].set(params["q1_b2"])
    b2 = b2.at[:, H_pad:H_pad + H].set(params["q2_b2"])

    # Lane-dense final layer: column 0 = q1, column 1 = q2, other lanes zero.
    w3 = jnp.zeros((H2, OUT_PAD), cdt)
    w3 = w3.at[:H, 0].set(params["q1_w3"][:, 0].astype(cdt))
    w3 = w3.at[H_pad:H_pad + H, 1].set(params["q2_w3"][:, 0].astype(cdt))
    b3 = jnp.zeros((1, OUT_PAD), f32)
    b3 = b3.at[0, 0].set(params["q1_b3"][0, 0])
    b3 = b3.at[0, 1].set(params["q2_b3"][0, 0])

    prep.update(w1h=w1h, w1a=w1a, b1=b1, w2=w2, b2=b2, w3=w3, b3=b3)
    dims = dict(F=F, A=A, H=H, F_pad=F_pad, A_pad=A_pad, H_pad=H_pad, H2=H2,
                TK=TK, Kv_pad=Kv_pad, Kp_pad=Kp_pad, compute_dtype=cdt)
    return prep, dims


# ------------------------------ forward pass --------------------------------

def critic_forward(obs, phy, action, prep, dims):
    B = obs.shape[0]
    cdt = dims["compute_dtype"]
    F_pad, A_pad, H2 = dims["F_pad"], dims["A_pad"], dims["H2"]
    Kv_pad, Kp_pad, TK = dims["Kv_pad"], dims["Kp_pad"], dims["TK"]

    TB = min(128, _round_up(B, SUBLANE))
    B_pad = _round_up(B, TB)
    nb, nk = B_pad // TB, Kv_pad // TK

    def pad2(a, r, c, dt):
        out = jnp.zeros((r, c), dt)
        return out.at[: a.shape[0], : a.shape[1]].set(a.astype(dt))

    obs_p = pad2(obs, B_pad, Kv_pad, cdt)
    phy_p = pad2(phy, B_pad, Kp_pad, cdt)
    act_p = pad2(action, B_pad, A_pad, cdt)

    def const(shape):
        return pl.BlockSpec(shape, lambda b, k: (0, 0))

    in_specs = [
        pl.BlockSpec((TB, TK), lambda b, k: (b, k)),      # obs (streamed over K)
        pl.BlockSpec((TK, F_pad), lambda b, k: (k, 0)),   # v_trunk_w (streamed)
        pl.BlockSpec((TB, Kp_pad), lambda b, k: (b, 0)),  # phy
        pl.BlockSpec((TB, A_pad), lambda b, k: (b, 0)),   # action
        const((1, F_pad)), const((1, F_pad)), const((1, F_pad)),   # vtb, vg, vbe
        const((Kp_pad, F_pad)),                                    # itw
        const((1, F_pad)), const((1, F_pad)), const((1, F_pad)),   # itb, ig, ibe
        const((F_pad, H2)), const((A_pad, H2)), const((1, H2)),    # w1h, w1a, b1
        const((H2, H2)), const((1, H2)),                           # w2, b2
        const((H2, OUT_PAD)), const((1, OUT_PAD)),                 # w3, b3
    ]
    out_spec = pl.BlockSpec((TB, OUT_PAD), lambda b, k: (b, 0))

    args = (obs_p, prep["vtw"], phy_p, act_p,
            prep["vtb"], prep["vg"], prep["vbe"],
            prep["itw"], prep["itb"], prep["ig"], prep["ibe"],
            prep["w1h"], prep["w1a"], prep["b1"],
            prep["w2"], prep["b2"], prep["w3"], prep["b3"])

    # Advisory cost estimate for XLA's scheduler.
    flops = 2 * B_pad * (Kv_pad * F_pad + Kp_pad * F_pad
                         + (F_pad + A_pad) * H2 + H2 * H2 + H2 * OUT_PAD)
    bytes_accessed = int(sum(int(a.size) * a.dtype.itemsize for a in args)
                         + B_pad * OUT_PAD * 4)
    cost = pl.CostEstimate(flops=int(flops),
                           transcendentals=int(2 * B_pad * F_pad),
                           bytes_accessed=bytes_accessed)

    # VMEM budget: double-buffered streamed tiles + resident weights + scratch.
    bpe = jnp.dtype(cdt).itemsize
    streamed = 2 * (TB * TK + TK * F_pad) * bpe
    resident = int(sum(int(a.size) * a.dtype.itemsize for a in args[2:]))
    scratch = TB * F_pad * 4 + 2 * TB * OUT_PAD * 4
    vmem_bytes = int(min(64 * 2**20,
                         max(16 * 2**20, 2 * (streamed + resident + scratch))))

    kernel = _make_kernel(dims["F"], F_pad, cdt)
    out = pl.pallas_call(
        kernel,
        out_shape=jax.ShapeDtypeStruct((B_pad, OUT_PAD), jnp.float32),
        grid_spec=pltpu.PrefetchScalarGridSpec(
            num_scalar_prefetch=0,
            grid=(nb, nk),
            in_specs=in_specs,
            out_specs=out_spec,
            scratch_shapes=[pltpu.VMEM((TB, F_pad), jnp.float32)]),
        compiler_params=pltpu.CompilerParams(
            dimension_semantics=("parallel", "arbitrary"),
            vmem_limit_bytes=vmem_bytes),
        cost_estimate=cost,
    )(*args)

    return out[:B, 0:1], out[:B, 1:2]


# ------------------------- parameter construction -------------------------

def _linear_params(key, fan_in, fan_out):
    kw, kb = jax.random.split(key)
    bound = 1.0 / jnp.sqrt(jnp.float32(fan_in))
    w = jax.random.uniform(kw, (fan_in, fan_out), jnp.float32, -bound, bound)
    b = jax.random.uniform(kb, (1, fan_out), jnp.float32, -bound, bound)
    return w, b


def make_params(key, vision_repr_dim, inner_state_repr_dim, action_dim,
                feature_dim, hidden_dim):
    keys = jax.random.split(key, 10)
    p = {}
    p["v_trunk_w"], p["v_trunk_b"] = _linear_params(keys[0], vision_repr_dim, feature_dim)
    p["v_ln_g"] = jnp.ones((1, feature_dim), jnp.float32)
    p["v_ln_b"] = jnp.zeros((1, feature_dim), jnp.float32)
    p["i_trunk_w"], p["i_trunk_b"] = _linear_params(keys[1], inner_state_repr_dim, feature_dim)
    p["i_ln_g"] = jnp.ones((1, feature_dim), jnp.float32)
    p["i_ln_b"] = jnp.zeros((1, feature_dim), jnp.float32)
    fa = feature_dim + action_dim
    p["q1_w1"], p["q1_b1"] = _linear_params(keys[2], fa, hidden_dim)
    p["q1_w2"], p["q1_b2"] = _linear_params(keys[3], hidden_dim, hidden_dim)
    p["q1_w3"], p["q1_b3"] = _linear_params(keys[4], hidden_dim, 1)
    p["q2_w1"], p["q2_b1"] = _linear_params(keys[5], fa, hidden_dim)
    p["q2_w2"], p["q2_b2"] = _linear_params(keys[6], hidden_dim, hidden_dim)
    p["q2_w3"], p["q2_b3"] = _linear_params(keys[7], hidden_dim, 1)
    return p


# ---------------------------- pure-JAX reference ---------------------------

def critic_reference(obs, phy, action, p):
    def trunk(x, w, b, g, be):
        y = x @ w + b
        mu = jnp.mean(y, -1, keepdims=True)
        var = jnp.mean((y - mu) ** 2, -1, keepdims=True)
        return jnp.tanh((y - mu) / jnp.sqrt(var + LN_EPS) * g + be)

    def q(ha, w1, b1, w2, b2, w3, b3):
        z = jnp.maximum(ha @ w1 + b1, 0.0)
        z = jnp.maximum(z @ w2 + b2, 0.0)
        return z @ w3 + b3

    h = trunk(obs, p["v_trunk_w"], p["v_trunk_b"], p["v_ln_g"], p["v_ln_b"])
    h = h + trunk(phy, p["i_trunk_w"], p["i_trunk_b"], p["i_ln_g"], p["i_ln_b"])
    ha = jnp.concatenate([h, action], axis=-1)
    q1 = q(ha, p["q1_w1"], p["q1_b1"], p["q1_w2"], p["q1_b2"], p["q1_w3"], p["q1_b3"])
    q2 = q(ha, p["q2_w1"], p["q2_b1"], p["q2_w2"], p["q2_b2"], p["q2_w3"], p["q2_b3"])
    return q1, q2


if __name__ == "__main__":
    B = 2
    VISION_REPR_DIM = 32
    INNER_STATE_REPR_DIM = 16
    ACTION_DIM = 4
    FEATURE_DIM = 32
    HIDDEN_DIM = 32

    root = jax.random.PRNGKey(0)
    k_obs, k_phy, k_act, k_par = jax.random.split(root, 4)

    obs = jax.random.normal(k_obs, (B, VISION_REPR_DIM), jnp.float32)
    phy = jax.random.normal(k_phy, (B, INNER_STATE_REPR_DIM), jnp.float32)
    action = jax.random.uniform(k_act, (B, ACTION_DIM), jnp.float32, -1.0, 1.0)

    params = make_params(k_par, VISION_REPR_DIM, INNER_STATE_REPR_DIM,
                         ACTION_DIM, FEATURE_DIM, HIDDEN_DIM)
    r1, r2 = critic_reference(obs, phy, action, params)

    # f32 MXU-operand path (reference parity).
    prep32, dims32 = prepare_params(
        params, feature_dim=FEATURE_DIM, action_dim=ACTION_DIM,
        hidden_dim=HIDDEN_DIM, compute_dtype=jnp.float32)
    q1, q2 = critic_forward(obs, phy, action, prep32, dims32)
    jax.block_until_ready((q1, q2))
    assert q1.shape == (B, 1) and q2.shape == (B, 1)
    assert jnp.allclose(q1, r1, rtol=1e-3, atol=1e-3)
    assert jnp.allclose(q2, r2, rtol=1e-3, atol=1e-3)

    # bf16 MXU-operand path (f32 accumulation + f32 LayerNorm statistics).
    prep16, dims16 = prepare_params(
        params, feature_dim=FEATURE_DIM, action_dim=ACTION_DIM,
        hidden_dim=HIDDEN_DIM, compute_dtype=jnp.bfloat16)
    q1b, q2b = critic_forward(obs, phy, action, prep16, dims16)
    jax.block_until_ready((q1b, q2b))
    assert jnp.allclose(q1b, r1, rtol=1e-1, atol=1e-1)
    assert jnp.allclose(q2b, r2, rtol=1e-1, atol=1e-1)

    print("KERNEL_OK")
</pallas_src>

<mosaic_0001>
module attributes {stable_mosaic.version = 11 : i64} {
  func.func @kernel(%arg0: i32, %arg1: i32, %arg2: memref<8x128xf32, #tpu.memory_space<vmem>>, %arg3: memref<128x128xf32, #tpu.memory_space<vmem>>, %arg4: memref<8x128xf32, #tpu.memory_space<vmem>>, %arg5: memref<8x128xf32, #tpu.memory_space<vmem>>, %arg6: memref<1x128xf32, #tpu.memory_space<vmem>>, %arg7: memref<1x128xf32, #tpu.memory_space<vmem>>, %arg8: memref<1x128xf32, #tpu.memory_space<vmem>>, %arg9: memref<128x128xf32, #tpu.memory_space<vmem>>, %arg10: memref<1x128xf32, #tpu.memory_space<vmem>>, %arg11: memref<1x128xf32, #tpu.memory_space<vmem>>, %arg12: memref<1x128xf32, #tpu.memory_space<vmem>>, %arg13: memref<128x256xf32, #tpu.memory_space<vmem>>, %arg14: memref<128x256xf32, #tpu.memory_space<vmem>>, %arg15: memref<1x256xf32, #tpu.memory_space<vmem>>, %arg16: memref<256x256xf32, #tpu.memory_space<vmem>>, %arg17: memref<1x256xf32, #tpu.memory_space<vmem>>, %arg18: memref<256x128xf32, #tpu.memory_space<vmem>>, %arg19: memref<1x128xf32, #tpu.memory_space<vmem>>, %arg20: memref<8x128xf32, #tpu.memory_space<vmem>>, %arg21: memref<8x128xf32, #tpu.memory_space<vmem>>) attributes {dimension_semantics = [#tpu.dimension_semantics<parallel>, #tpu.dimension_semantics<arbitrary>], iteration_bounds = array<i64: 1, 1>, scalar_prefetch = 0 : i64, scratch_operands = 1 : i64, tpu.core_type = #tpu.core_type<tc>, window_params = [{transform_indices = @transform_0, window_bounds = array<i64: 8, 128>}, {transform_indices = @transform_1, window_bounds = array<i64: 128, 128>}, {transform_indices = @transform_2, window_bounds = array<i64: 8, 128>}, {transform_indices = @transform_3, window_bounds = array<i64: 8, 128>}, {pipeline_mode = #tpu.pipeline_mode<synchronous>, transform_indices = @transform_4, window_bounds = array<i64: 1, 128>}, {pipeline_mode = #tpu.pipeline_mode<synchronous>, transform_indices = @transform_5, window_bounds = array<i64: 1, 128>}, {pipeline_mode = #tpu.pipeline_mode<synchronous>, transform_indices = @transform_6, window_bounds = array<i64: 1, 128>}, {pipeline_mode = #tpu.pipeline_mode<synchronous>, transform_indices = @transform_7, window_bounds = array<i64: 128, 128>}, {pipeline_mode = #tpu.pipeline_mode<synchronous>, transform_indices = @transform_8, window_bounds = array<i64: 1, 128>}, {pipeline_mode = #tpu.pipeline_mode<synchronous>, transform_indices = @transform_9, window_bounds = array<i64: 1, 128>}, {pipeline_mode = #tpu.pipeline_mode<synchronous>, transform_indices = @transform_10, window_bounds = array<i64: 1, 128>}, {pipeline_mode = #tpu.pipeline_mode<synchronous>, transform_indices = @transform_11, window_bounds = array<i64: 128, 256>}, {pipeline_mode = #tpu.pipeline_mode<synchronous>, transform_indices = @transform_12, window_bounds = array<i64: 128, 256>}, {pipeline_mode = #tpu.pipeline_mode<synchronous>, transform_indices = @transform_13, window_bounds = array<i64: 1, 256>}, {pipeline_mode = #tpu.pipeline_mode<synchronous>, transform_indices = @transform_14, window_bounds = array<i64: 256, 256>}, {pipeline_mode = #tpu.pipeline_mode<synchronous>, transform_indices = @transform_15, window_bounds = array<i64: 1, 256>}, {pipeline_mode = #tpu.pipeline_mode<synchronous>, transform_indices = @transform_16, window_bounds = array<i64: 256, 128>}, {pipeline_mode = #tpu.pipeline_mode<synchronous>, transform_indices = @transform_17, window_bounds = array<i64: 1, 128>}, {transform_indices = @transform_18, window_bounds = array<i64: 8, 128>}]} {
    %c0_i32 = arith.constant 0 : i32
    %0 = arith.cmpi eq, %arg1, %c0_i32 : i32
    %1 = arith.extui %0 : i1 to i32
    %c0_i32_0 = arith.constant 0 : i32
    %2 = arith.cmpi ne, %1, %c0_i32_0 : i32
    scf.if %2 {
      %cst_10 = arith.constant 0.000000e+00 : f32
      %12 = vector.broadcast %cst_10 : f32 to vector<8x128xf32>
      %c0_11 = arith.constant 0 : index
      %c0_12 = arith.constant 0 : index
      %13 = vector.load %arg21[%c0_11, %c0_12] : memref<8x128xf32, #tpu.memory_space<vmem>>, vector<8x128xf32>
      tpu.vector_store %arg21[%c0_11, %c0_12], %12 {strides = array<i32>} : memref<8x128xf32, #tpu.memory_space<vmem>>, vector<8x128xf32>,
    } else {
    }
    %c0 = arith.constant 0 : index
    %c0_1 = arith.constant 0 : index
    %3 = vector.load %arg21[%c0, %c0_1] : memref<8x128xf32, #tpu.memory_space<vmem>>, vector<8x128xf32>
    %c0_2 = arith.constant 0 : index
    %c0_3 = arith.constant 0 : index
    %4 = vector.load %arg2[%c0_2, %c0_3] : memref<8x128xf32, #tpu.memory_space<vmem>>, vector<8x128xf32>
    %c0_4 = arith.constant 0 : index
    %c0_5 = arith.constant 0 : index
    %5 = vector.load %arg3[%c0_4, %c0_5] : memref<128x128xf32, #tpu.memory_space<vmem>>, vector<128x128xf32>
    %cst = arith.constant dense<0.000000e+00> : vector<8x128xf32>
    %6 = tpu.matmul %4, %5, %cst {dimension_numbers = #tpu.dot_dimension_numbers<[1], [0], [0], [1], [0, 0, 1, 1], [], []>} : vector<8x128xf32>, vector<128x128xf32>, vector<8x128xf32> -> vector<8x128xf32>
    %7 = arith.addf %3, %6 : vector<8x128xf32>
    %c0_6 = arith.constant 0 : index
    %c0_7 = arith.constant 0 : index
    %8 = vector.load %arg21[%c0_6, %c0_7] : memref<8x128xf32, #tpu.memory_space<vmem>>, vector<8x128xf32>
    tpu.vector_store %arg21[%c0_6, %c0_7], %7 {strides = array<i32>} : memref<8x128xf32, #tpu.memory_space<vmem>>, vector<8x128xf32>,
    %c0_i32_8 = arith.constant 0 : i32
    %9 = arith.cmpi eq, %arg1, %c0_i32_8 : i32
    %10 = arith.extui %9 : i1 to i32
    %c0_i32_9 = arith.constant 0 : i32
    %11 = arith.cmpi ne, %10, %c0_i32_9 : i32
    scf.if %11 {
      %c0_10 = arith.constant 0 : index
      %c0_11 = arith.constant 0 : index
      %12 = vector.load %arg21[%c0_10, %c0_11] : memref<8x128xf32, #tpu.memory_space<vmem>>, vector<8x128xf32>
      %c0_12 = arith.constant 0 : index
      %c0_13 = arith.constant 0 : index
      %13 = vector.load %arg6[%c0_12, %c0_13] : memref<1x128xf32, #tpu.memory_space<vmem>>, vector<1x128xf32>
      %14 = vector.broadcast %13 : vector<1x128xf32> to vector<8x128xf32>
      %15 = arith.addf %12, %14 : vector<8x128xf32>
      %c0_14 = arith.constant 0 : index
      %c0_15 = arith.constant 0 : index
      %16 = vector.load %arg7[%c0_14, %c0_15] : memref<1x128xf32, #tpu.memory_space<vmem>>, vector<1x128xf32>
      %c0_16 = arith.constant 0 : index
      %c0_17 = arith.constant 0 : index
      %17 = vector.load %arg8[%c0_16, %c0_17] : memref<1x128xf32, #tpu.memory_space<vmem>>, vector<1x128xf32>
      %18 = tpu.iota {dimensions = array<i32: 1>} : vector<8x128xi32>
      %c32_i32 = arith.constant 32 : i32
      %19 = vector.broadcast %c32_i32 : i32 to vector<8x128xi32>
      %20 = arith.cmpi slt, %18, %19 : vector<8x128xi32>
      %cst_18 = arith.constant 0.000000e+00 : f32
      %21 = vector.broadcast %cst_18 : f32 to vector<8x128xf32>
      %22 = arith.select %20, %15, %21 : vector<8x128xi1>, vector<8x128xf32>
      %cst_19 = arith.constant dense<0.000000e+00> : vector<8xf32>
      %23 = vector.multi_reduction <add>, %22, %cst_19 [1] : vector<8x128xf32> to vector<8xf32>
      %24 = vector.shape_cast %23 : vector<8xf32> to vector<8x1xf32>
      %cst_20 = arith.constant 3.125000e-02 : f32
      %25 = vector.broadcast %cst_20 : f32 to vector<8x1xf32>
      %26 = arith.mulf %24, %25 : vector<8x1xf32>
      %27 = vector.broadcast %26 : vector<8x1xf32> to vector<8x128xf32>
      %28 = arith.subf %15, %27 : vector<8x128xf32>
      %cst_21 = arith.constant 0.000000e+00 : f32
      %29 = vector.broadcast %cst_21 : f32 to vector<8x128xf32>
      %30 = arith.select %20, %28, %29 : vector<8x128xi1>, vector<8x128xf32>
      %31 = arith.mulf %30, %30 : vector<8x128xf32>
      %cst_22 = arith.constant dense<0.000000e+00> : vector<8xf32>
      %32 = vector.multi_reduction <add>, %31, %cst_22 [1] : vector<8x128xf32> to vector<8xf32>
      %33 = vector.shape_cast %32 : vector<8xf32> to vector<8x1xf32>
      %cst_23 = arith.constant 3.125000e-02 : f32
      %34 = vector.broadcast %cst_23 : f32 to vector<8x1xf32>
      %35 = arith.mulf %33, %34 : vector<8x1xf32>
      %36 = vector.broadcast %26 : vector<8x1xf32> to vector<8x128xf32>
      %37 = arith.subf %15, %36 : vector<8x128xf32>
      %cst_24 = arith.constant 9.99999974E-6 : f32
      %38 = vector.broadcast %cst_24 : f32 to vector<8x1xf32>
      %39 = arith.addf %35, %38 : vector<8x1xf32>
      %40 = math.rsqrt %39 : vector<8x1xf32>
      %41 = vector.broadcast %40 : vector<8x1xf32> to vector<8x128xf32>
      %42 = arith.mulf %37, %41 : vector<8x128xf32>
      %43 = vector.broadcast %16 : vector<1x128xf32> to vector<8x128xf32>
      %44 = arith.mulf %42, %43 : vector<8x128xf32>
      %45 = vector.broadcast %17 : vector<1x128xf32> to vector<8x128xf32>
      %46 = arith.addf %44, %45 : vector<8x128xf32>
      %47 = math.tanh %46 : vector<8x128xf32>
      %c0_25 = arith.constant 0 : index
      %c0_26 = arith.constant 0 : index
      %48 = vector.load %arg4[%c0_25, %c0_26] : memref<8x128xf32, #tpu.memory_space<vmem>>, vector<8x128xf32>
      %c0_27 = arith.constant 0 : index
      %c0_28 = arith.constant 0 : index
      %49 = vector.load %arg9[%c0_27, %c0_28] : memref<128x128xf32, #tpu.memory_space<vmem>>, vector<128x128xf32>
      %cst_29 = arith.constant dense<0.000000e+00> : vector<8x128xf32>
      %50 = tpu.matmul %48, %49, %cst_29 {dimension_numbers = #tpu.dot_dimension_numbers<[1], [0], [0], [1], [0, 0, 1, 1], [], []>} : vector<8x128xf32>, vector<128x128xf32>, vector<8x128xf32> -> vector<8x128xf32>
      %c0_30 = arith.constant 0 : index
      %c0_31 = arith.constant 0 : index
      %51 = vector.load %arg10[%c0_30, %c0_31] : memref<1x128xf32, #tpu.memory_space<vmem>>, vector<1x128xf32>
      %52 = vector.broadcast %51 : vector<1x128xf32> to vector<8x128xf32>
      %53 = arith.addf %50, %52 : vector<8x128xf32>
      %c0_32 = arith.constant 0 : index
      %c0_33 = arith.constant 0 : index
      %54 = vector.load %arg11[%c0_32, %c0_33] : memref<1x128xf32, #tpu.memory_space<vmem>>, vector<1x128xf32>
      %c0_34 = arith.constant 0 : index
      %c0_35 = arith.constant 0 : index
      %55 = vector.load %arg12[%c0_34, %c0_35] : memref<1x128xf32, #tpu.memory_space<vmem>>, vector<1x128xf32>
      %56 = tpu.iota {dimensions = array<i32: 1>} : vector<8x128xi32>
      %c32_i32_36 = arith.constant 32 : i32
      %57 = vector.broadcast %c32_i32_36 : i32 to vector<8x128xi32>
      %58 = arith.cmpi slt, %56, %57 : vector<8x128xi32>
      %cst_37 = arith.constant 0.000000e+00 : f32
      %59 = vector.broadcast %cst_37 : f32 to vector<8x128xf32>
      %60 = arith.select %58, %53, %59 : vector<8x128xi1>, vector<8x128xf32>
      %cst_38 = arith.constant dense<0.000000e+00> : vector<8xf32>
      %61 = vector.multi_reduction <add>, %60, %cst_38 [1] : vector<8x128xf32> to vector<8xf32>
      %62 = vector.shape_cast %61 : vector<8xf32> to vector<8x1xf32>
      %cst_39 = arith.constant 3.125000e-02 : f32
      %63 = vector.broadcast %cst_39 : f32 to vector<8x1xf32>
      %64 = arith.mulf %62, %63 : vector<8x1xf32>
      %65 = vector.broadcast %64 : vector<8x1xf32> to vector<8x128xf32>
      %66 = arith.subf %53, %65 : vector<8x128xf32>
      %cst_40 = arith.constant 0.000000e+00 : f32
      %67 = vector.broadcast %cst_40 : f32 to vector<8x128xf32>
      %68 = arith.select %58, %66, %67 : vector<8x128xi1>, vector<8x128xf32>
      %69 = arith.mulf %68, %68 : vector<8x128xf32>
      %cst_41 = arith.constant dense<0.000000e+00> : vector<8xf32>
      %70 = vector.multi_reduction <add>, %69, %cst_41 [1] : vector<8x128xf32> to vector<8xf32>
      %71 = vector.shape_cast %70 : vector<8xf32> to vector<8x1xf32>
      %cst_42 = arith.constant 3.125000e-02 : f32
      %72 = vector.broadcast %cst_42 : f32 to vector<8x1xf32>
      %73 = arith.mulf %71, %72 : vector<8x1xf32>
      %74 = vector.broadcast %64 : vector<8x1xf32> to vector<8x128xf32>
      %75 = arith.subf %53, %74 : vector<8x128xf32>
      %cst_43 = arith.constant 9.99999974E-6 : f32
      %76 = vector.broadcast %cst_43 : f32 to vector<8x1xf32>
      %77 = arith.addf %73, %76 : vector<8x1xf32>
      %78 = math.rsqrt %77 : vector<8x1xf32>
      %79 = vector.broadcast %78 : vector<8x1xf32> to vector<8x128xf32>
      %80 = arith.mulf %75, %79 : vector<8x128xf32>
      %81 = vector.broadcast %54 : vector<1x128xf32> to vector<8x128xf32>
      %82 = arith.mulf %80, %81 : vector<8x128xf32>
      %83 = vector.broadcast %55 : vector<1x128xf32> to vector<8x128xf32>
      %84 = arith.addf %82, %83 : vector<8x128xf32>
      %85 = math.tanh %84 : vector<8x128xf32>
      %86 = arith.addf %47, %85 : vector<8x128xf32>
      %c0_44 = arith.constant 0 : index
      %c0_45 = arith.constant 0 : index
      %87 = vector.load %arg13[%c0_44, %c0_45] : memref<128x256xf32, #tpu.memory_space<vmem>>, vector<128x256xf32>
      %cst_46 = arith.constant dense<0.000000e+00> : vector<8x256xf32>
      %88 = tpu.matmul %86, %87, %cst_46 {dimension_numbers = #tpu.dot_dimension_numbers<[1], [0], [0], [1], [0, 0, 1, 1], [], []>} : vector<8x128xf32>, vector<128x256xf32>, vector<8x256xf32> -> vector<8x256xf32>
      %c0_47 = arith.constant 0 : index
      %c0_48 = arith.constant 0 : index
      %89 = vector.load %arg5[%c0_47, %c0_48] : memref<8x128xf32, #tpu.memory_space<vmem>>, vector<8x128xf32>
      %c0_49 = arith.constant 0 : index
      %c0_50 = arith.constant 0 : index
      %90 = vector.load %arg14[%c0_49, %c0_50] : memref<128x256xf32, #tpu.memory_space<vmem>>, vector<128x256xf32>
      %cst_51 = arith.constant dense<0.000000e+00> : vector<8x256xf32>
      %91 = tpu.matmul %89, %90, %cst_51 {dimension_numbers = #tpu.dot_dimension_numbers<[1], [0], [0], [1], [0, 0, 1, 1], [], []>} : vector<8x128xf32>, vector<128x256xf32>, vector<8x256xf32> -> vector<8x256xf32>
      %92 = arith.addf %88, %91 : vector<8x256xf32>
      %c0_52 = arith.constant 0 : index
      %c0_53 = arith.constant 0 : index
      %93 = vector.load %arg15[%c0_52, %c0_53] : memref<1x256xf32, #tpu.memory_space<vmem>>, vector<1x256xf32>
      %94 = vector.broadcast %93 : vector<1x256xf32> to vector<8x256xf32>
      %95 = arith.addf %92, %94 : vector<8x256xf32>
      %cst_54 = arith.constant 0.000000e+00 : f32
      %96 = vector.broadcast %cst_54 : f32 to vector<8x256xf32>
      %97 = arith.maximumf %95, %96 : vector<8x256xf32>
      %c0_55 = arith.constant 0 : index
      %c0_56 = arith.constant 0 : index
      %98 = vector.load %arg16[%c0_55, %c0_56] : memref<256x256xf32, #tpu.memory_space<vmem>>, vector<256x256xf32>
      %cst_57 = arith.constant dense<0.000000e+00> : vector<8x256xf32>
      %99 = tpu.matmul %97, %98, %cst_57 {dimension_numbers = #tpu.dot_dimension_numbers<[1], [0], [0], [1], [0, 0, 1, 1], [], []>} : vector<8x256xf32>, vector<256x256xf32>, vector<8x256xf32> -> vector<8x256xf32>
      %c0_58 = arith.constant 0 : index
      %c0_59 = arith.constant 0 : index
      %100 = vector.load %arg17[%c0_58, %c0_59] : memref<1x256xf32, #tpu.memory_space<vmem>>, vector<1x256xf32>
      %101 = vector.broadcast %100 : vector<1x256xf32> to vector<8x256xf32>
      %102 = arith.addf %99, %101 : vector<8x256xf32>
      %cst_60 = arith.constant 0.000000e+00 : f32
      %103 = vector.broadcast %cst_60 : f32 to vector<8x256xf32>
      %104 = arith.maximumf %102, %103 : vector<8x256xf32>
      %c0_61 = arith.constant 0 : index
      %c0_62 = arith.constant 0 : index
      %105 = vector.load %arg18[%c0_61, %c0_62] : memref<256x128xf32, #tpu.memory_space<vmem>>, vector<256x128xf32>
      %cst_63 = arith.constant dense<0.000000e+00> : vector<8x128xf32>
      %106 = tpu.matmul %104, %105, %cst_63 {dimension_numbers = #tpu.dot_dimension_numbers<[1], [0], [0], [1], [0, 0, 1, 1], [], []>} : vector<8x256xf32>, vector<256x128xf32>, vector<8x128xf32> -> vector<8x128xf32>
      %c0_64 = arith.constant 0 : index
      %c0_65 = arith.constant 0 : index
      %107 = vector.load %arg19[%c0_64, %c0_65] : memref<1x128xf32, #tpu.memory_space<vmem>>, vector<1x128xf32>
      %108 = vector.broadcast %107 : vector<1x128xf32> to vector<8x128xf32>
      %109 = arith.addf %106, %108 : vector<8x128xf32>
      %c0_66 = arith.constant 0 : index
      %c0_67 = arith.constant 0 : index
      %110 = vector.load %arg20[%c0_66, %c0_67] : memref<8x128xf32, #tpu.memory_space<vmem>>, vector<8x128xf32>
      tpu.vector_store %arg20[%c0_66, %c0_67], %109 {strides = array<i32>} : memref<8x128xf32, #tpu.memory_space<vmem>>, vector<8x128xf32>,
    } else {
    }
    return
  }
  func.func @transform_0(%arg0: i32, %arg1: i32) -> (i32, i32) {
    %c0_i32 = arith.constant 0 : i32
    return %arg0, %arg1 : i32, i32
  }
  func.func @transform_1(%arg0: i32, %arg1: i32) -> (i32, i32) {
    %c0_i32 = arith.constant 0 : i32
    %c0_i32_0 = arith.constant 0 : i32
    return %arg1, %c0_i32 : i32, i32
  }
  func.func @transform_2(%arg0: i32, %arg1: i32) -> (i32, i32) {
    %c0_i32 = arith.constant 0 : i32
    %c0_i32_0 = arith.constant 0 : i32
    return %arg0, %c0_i32 : i32, i32
  }
  func.func @transform_3(%arg0: i32, %arg1: i32) -> (i32, i32) {
    %c0_i32 = arith.constant 0 : i32
    %c0_i32_0 = arith.constant 0 : i32
    return %arg0, %c0_i32 : i32, i32
  }
  func.func @transform_4(%arg0: i32, %arg1: i32) -> (i32, i32) {
    %c0_i32 = arith.constant 0 : i32
    %c0_i32_0 = arith.constant 0 : i32
    %c0_i32_1 = arith.constant 0 : i32
    return %c0_i32, %c0_i32_0 : i32, i32
  }
  func.func @transform_5(%arg0: i32, %arg1: i32) -> (i32, i32) {
    %c0_i32 = arith.constant 0 : i32
    %c0_i32_0 = arith.constant 0 : i32
    %c0_i32_1 = arith.constant 0 : i32
    return %c0_i32, %c0_i32_0 : i32, i32
  }
  func.func @transform_6(%arg0: i32, %arg1: i32) -> (i32, i32) {
    %c0_i32 = arith.constant 0 : i32
    %c0_i32_0 = arith.constant 0 : i32
    %c0_i32_1 = arith.constant 0 : i32
    return %c0_i32, %c0_i32_0 : i32, i32
  }
  func.func @transform_7(%arg0: i32, %arg1: i32) -> (i32, i32) {
    %c0_i32 = arith.constant 0 : i32
    %c0_i32_0 = arith.constant 0 : i32
    %c0_i32_1 = arith.constant 0 : i32
    return %c0_i32, %c0_i32_0 : i32, i32
  }
  func.func @transform_8(%arg0: i32, %arg1: i32) -> (i32, i32) {
    %c0_i32 = arith.constant 0 : i32
    %c0_i32_0 = arith.constant 0 : i32
    %c0_i32_1 = arith.constant 0 : i32
    return %c0_i32, %c0_i32_0 : i32, i32
  }
  func.func @transform_9(%arg0: i32, %arg1: i32) -> (i32, i32) {
    %c0_i32 = arith.constant 0 : i32
    %c0_i32_0 = arith.constant 0 : i32
    %c0_i32_1 = arith.constant 0 : i32
    return %c0_i32, %c0_i32_0 : i32, i32
  }
  func.func @transform_10(%arg0: i32, %arg1: i32) -> (i32, i32) {
    %c0_i32 = arith.constant 0 : i32
    %c0_i32_0 = arith.constant 0 : i32
    %c0_i32_1 = arith.constant 0 : i32
    return %c0_i32, %c0_i32_0 : i32, i32
  }
  func.func @transform_11(%arg0: i32, %arg1: i32) -> (i32, i32) {
    %c0_i32 = arith.constant 0 : i32
    %c0_i32_0 = arith.constant 0 : i32
    %c0_i32_1 = arith.constant 0 : i32
    return %c0_i32, %c0_i32_0 : i32, i32
  }
  func.func @transform_12(%arg0: i32, %arg1: i32) -> (i32, i32) {
    %c0_i32 = arith.constant 0 : i32
    %c0_i32_0 = arith.constant 0 : i32
    %c0_i32_1 = arith.constant 0 : i32
    return %c0_i32, %c0_i32_0 : i32, i32
  }
  func.func @transform_13(%arg0: i32, %arg1: i32) -> (i32, i32) {
    %c0_i32 = arith.constant 0 : i32
    %c0_i32_0 = arith.constant 0 : i32
    %c0_i32_1 = arith.constant 0 : i32
    return %c0_i32, %c0_i32_0 : i32, i32
  }
  func.func @transform_14(%arg0: i32, %arg1: i32) -> (i32, i32) {
    %c0_i32 = arith.constant 0 : i32
    %c0_i32_0 = arith.constant 0 : i32
    %c0_i32_1 = arith.constant 0 : i32
    return %c0_i32, %c0_i32_0 : i32, i32
  }
  func.func @transform_15(%arg0: i32, %arg1: i32) -> (i32, i32) {
    %c0_i32 = arith.constant 0 : i32
    %c0_i32_0 = arith.constant 0 : i32
    %c0_i32_1 = arith.constant 0 : i32
    return %c0_i32, %c0_i32_0 : i32, i32
  }
  func.func @transform_16(%arg0: i32, %arg1: i32) -> (i32, i32) {
    %c0_i32 = arith.constant 0 : i32
    %c0_i32_0 = arith.constant 0 : i32
    %c0_i32_1 = arith.constant 0 : i32
    return %c0_i32, %c0_i32_0 : i32, i32
  }
  func.func @transform_17(%arg0: i32, %arg1: i32) -> (i32, i32) {
    %c0_i32 = arith.constant 0 : i32
    %c0_i32_0 = arith.constant 0 : i32
    %c0_i32_1 = arith.constant 0 : i32
    return %c0_i32, %c0_i32_0 : i32, i32
  }
  func.func @transform_18(%arg0: i32, %arg1: i32) -> (i32, i32) {
    %c0_i32 = arith.constant 0 : i32
    %c0_i32_0 = arith.constant 0 : i32
    return %arg0, %c0_i32 : i32, i32
  }
}

</mosaic_0001>

<llo_original>
// kernel: tpu_custom_call.1
$region0: #{tpu_custom_call.1}
  #allocation0 [shape = 'u32[]', space=smem, size = 0x4, offset = 0x4, fixed_abs, tag = 'smem constant byte address 0x4 - core index']
  #allocation1 [shape = 'u32[144,128]{1,0:T(1,128)}', space=vmem, size = 0x12000, scoped, tag = 'internal scratch']
  #allocation2 [shape = 'f32[8,128]{1,0:T(8,128)}', space=vmem, size = 0x1000, scoped, tag = 'scratch operand']
  %s0 = inlined_call_operand.hbm [shape: f32[8,128], index: 0, kind: input, shape index: {}]
  %s1 = inlined_call_operand.hbm [shape: f32[128,128], index: 1, kind: input, shape index: {}]
  %s2 = inlined_call_operand.hbm [shape: f32[8,128], index: 2, kind: input, shape index: {}]
  %s3 = inlined_call_operand.vmem [shape: f32[8,128], index: 3, kind: input, shape index: {}]
  %s4 = inlined_call_operand.vmem [shape: f32[1,128], index: 4, kind: input, shape index: {}]
  %s5 = inlined_call_operand.vmem [shape: f32[1,128], index: 5, kind: input, shape index: {}]
  %s6 = inlined_call_operand.vmem [shape: f32[1,128], index: 6, kind: input, shape index: {}]
  %s7 = inlined_call_operand.hbm [shape: f32[128,128], index: 7, kind: input, shape index: {}]
  %s8 = inlined_call_operand.vmem [shape: f32[1,128], index: 8, kind: input, shape index: {}]
  %s9 = inlined_call_operand.vmem [shape: f32[1,128], index: 9, kind: input, shape index: {}]
  %s10 = inlined_call_operand.vmem [shape: f32[1,128], index: 10, kind: input, shape index: {}]
  %s11 = inlined_call_operand.hbm [shape: f32[128,256], index: 11, kind: input, shape index: {}]
  %s12 = inlined_call_operand.hbm [shape: f32[128,256], index: 12, kind: input, shape index: {}]
  %s13 = inlined_call_operand.vmem [shape: f32[1,256], index: 13, kind: input, shape index: {}]
  %s14 = inlined_call_operand.hbm [shape: f32[256,256], index: 14, kind: input, shape index: {}]
  %s15 = inlined_call_operand.vmem [shape: f32[1,256], index: 15, kind: input, shape index: {}]
  %s16 = inlined_call_operand.hbm [shape: f32[256,128], index: 16, kind: input, shape index: {}]
  %s17 = inlined_call_operand.vmem [shape: f32[1,128], index: 17, kind: input, shape index: {}]
  %s18 = inlined_call_operand.hbm [shape: f32[8,128], index: 18, kind: output, shape index: {}]
  %s19 = sld [smem:[#allocation0]]
  $region122: #{tpu_custom_call.1} parent=0
    _
  %s21 = ssub.s32 1, %s19
  %s22 = scalar_select 0, %s21, %s19
  $region1: #{tpu_custom_call.1} parent=0
    #allocation3 [shape = 'u8[4096]{0}', space=vmem, size = 0x1000, scoped, tag = 'input window, operand 0, single buffered']
    #allocation4 [shape = 's32[1]{0}', space=sflag, size = 0x4, scoped, tag = 'scoped memory for tpu_custom_call.1']
    #allocation5 [shape = 's32[1]{0}', space=sflag, size = 0x4, scoped, tag = 'scoped memory for tpu_custom_call.1']
    #allocation6 [shape = 'u8[65536]{0}', space=vmem, size = 0x10000, scoped, tag = 'input window, operand 1, single buffered']
    #allocation7 [shape = 's32[1]{0}', space=sflag, size = 0x4, scoped, tag = 'scoped memory for tpu_custom_call.1']
    #allocation8 [shape = 'u8[4096]{0}', space=vmem, size = 0x1000, scoped, tag = 'input window, operand 2, single buffered']
    #allocation9 [shape = 'u8[65536]{0}', space=vmem, size = 0x10000, scoped, tag = 'input window, operand 7, single buffered']
    #allocation10 [shape = 's32[1]{0}', space=sflag, size = 0x4, scoped, tag = 'scoped memory for tpu_custom_call.1']
    #allocation11 [shape = 'u8[131072]{0}', space=vmem, size = 0x20000, scoped, tag = 'input window, operand 11, single buffered']
    #allocation12 [shape = 'u8[131072]{0}', space=vmem, size = 0x20000, scoped, tag = 'input window, operand 12, single buffered']
    #allocation13 [shape = 's32[1]{0}', space=sflag, size = 0x4, scoped, tag = 'scoped memory for tpu_custom_call.1']
    #allocation14 [shape = 'u8[262144]{0}', space=vmem, size = 0x40000, scoped, tag = 'input window, operand 14, single buffered']
    #allocation15 [shape = 'u8[131072]{0}', space=vmem, size = 0x20000, scoped, tag = 'input window, operand 16, single buffered']
    #allocation16 [shape = 's32[1]{0}', space=sflag, size = 0x4, scoped, tag = 'scoped memory for tpu_custom_call.1']
    #allocation17 [shape = 'u8[4096]{0}', space=vmem, size = 0x1000, scoped, tag = 'output window, operand 0, single buffered']
    %23 = vsyncpa [#allocation4], 0
    %24 = vsyncpa [#allocation7], 0
    %25 = vsyncpa [#allocation10], 0
    %26 = vsyncpa [#allocation13], 0
    %27 = vsyncpa [#allocation16], 0
    %28 = vsyncpa [#allocation5], 0
    // Predicated region
    $region2: #{tpu_custom_call.1} parent=1 // pred_check
      _
    $region3: #{tpu_custom_call.1} parent=1 // pred_check_branch
      %30 = sbr.rel (0) target = $region5
    $region4: #{tpu_custom_call.1} parent=1 // pred_region
      %s32 = ssub.s32 128, 128
      %33 = vsyncadd [#allocation4], %s32
      %s35 = sshll.u32 [#allocation3], 4
      %s36 = int_to_ptr.vmem [resolvable:$true] %s35
      %38 = dma.hbm_to_vmem [thread:$0]  %s0, 128, %s36, [#allocation4]
    $region5: #{tpu_custom_call.1} parent=1 // pred_fallthru
      _
    // Predicated region
    $region6: #{tpu_custom_call.1} parent=1 // pred_check
      _
    $region7: #{tpu_custom_call.1} parent=1 // pred_check_branch
      %40 = sbr.rel (0) target = $region9
    $region8: #{tpu_custom_call.1} parent=1 // pred_region
      %s42 = ssub.s32 2048, 2048
      %43 = vsyncadd [#allocation7], %s42
      %s44 = sshll.u32 [#allocation6], 4
      %s45 = int_to_ptr.vmem [resolvable:$true] %s44
      %50 = dma.hbm_to_vmem [thread:$0]  %s1, 2048, %s45, [#allocation7], 128, 128, 8
    $region9: #{tpu_custom_call.1} parent=1 // pred_fallthru
      _
    // Predicated region
    $region10: #{tpu_custom_call.1} parent=1 // pred_check
      _
    $region11: #{tpu_custom_call.1} parent=1 // pred_check_branch
      %52 = sbr.rel (0) target = $region13
    $region12: #{tpu_custom_call.1} parent=1 // pred_region
      %s54 = ssub.s32 128, 128
      %55 = vsyncadd [#allocation7], %s54
      %s57 = sshll.u32 [#allocation8], 4
      %s58 = int_to_ptr.vmem [resolvable:$true] %s57
      %60 = dma.hbm_to_vmem [thread:$0]  %s2, 128, %s58, [#allocation7]
    $region13: #{tpu_custom_call.1} parent=1 // pred_fallthru
      _
    // Predicated region
    $region14: #{tpu_custom_call.1} parent=1 // pred_check
      _
    $region15: #{tpu_custom_call.1} parent=1 // pred_check_branch
      %62 = sbr.rel (0) target = $region17
    $region16: #{tpu_custom_call.1} parent=1 // pred_region
      _
    $region17: #{tpu_custom_call.1} parent=1 // pred_fallthru
      _
    // Predicated region
    $region18: #{tpu_custom_call.1} parent=1 // pred_check
      _
    $region19: #{tpu_custom_call.1} parent=1 // pred_check_branch
      %64 = sbr.rel (0) target = $region21
    $region20: #{tpu_custom_call.1} parent=1 // pred_region
      _
    $region21: #{tpu_custom_call.1} parent=1 // pred_fallthru
      _
    // Predicated region
    $region22: #{tpu_custom_call.1} parent=1 // pred_check
      _
    $region23: #{tpu_custom_call.1} parent=1 // pred_check_branch
      %66 = sbr.rel (0) target = $region25
    $region24: #{tpu_custom_call.1} parent=1 // pred_region
      _
    $region25: #{tpu_custom_call.1} parent=1 // pred_fallthru
      _
    // Predicated region
    $region26: #{tpu_custom_call.1} parent=1 // pred_check
      _
    $region27: #{tpu_custom_call.1} parent=1 // pred_check_branch
      %68 = sbr.rel (0) target = $region29
    $region28: #{tpu_custom_call.1} parent=1 // pred_region
      _
    $region29: #{tpu_custom_call.1} parent=1 // pred_fallthru
      _
    // Predicated region
    $region30: #{tpu_custom_call.1} parent=1 // pred_check
      _
    $region31: #{tpu_custom_call.1} parent=1 // pred_check_branch
      %70 = sbr.rel (0) target = $region33
    $region32: #{tpu_custom_call.1} parent=1 // pred_region
      %s72 = ssub.s32 2048, 2048
      %73 = vsyncadd [#allocation10], %s72
      %s74 = sshll.u32 [#allocation9], 4
      %s75 = int_to_ptr.vmem [resolvable:$true] %s74
      %80 = dma.hbm_to_vmem [thread:$0]  %s7, 2048, %s75, [#allocation10], 128, 128, 8
    $region33: #{tpu_custom_call.1} parent=1 // pred_fallthru
      _
    // Predicated region
    $region34: #{tpu_custom_call.1} parent=1 // pred_check
      _
    $region35: #{tpu_custom_call.1} parent=1 // pred_check_branch
      %82 = sbr.rel (0) target = $region37
    $region36: #{tpu_custom_call.1} parent=1 // pred_region
      _
    $region37: #{tpu_custom_call.1} parent=1 // pred_fallthru
      _
    // Predicated region
    $region38: #{tpu_custom_call.1} parent=1 // pred_check
      _
    $region39: #{tpu_custom_call.1} parent=1 // pred_check_branch
      %84 = sbr.rel (0) target = $region41
    $region40: #{tpu_custom_call.1} parent=1 // pred_region
      _
    $region41: #{tpu_custom_call.1} parent=1 // pred_fallthru
      _
    // Predicated region
    $region42: #{tpu_custom_call.1} parent=1 // pred_check
      _
    $region43: #{tpu_custom_call.1} parent=1 // pred_check_branch
      %86 = sbr.rel (0) target = $region45
    $region44: #{tpu_custom_call.1} parent=1 // pred_region
      _
    $region45: #{tpu_custom_call.1} parent=1 // pred_fallthru
      _
    // Predicated region
    $region46: #{tpu_custom_call.1} parent=1 // pred_check
      _
    $region47: #{tpu_custom_call.1} parent=1 // pred_check_branch
      %88 = sbr.rel (0) target = $region49
    $region48: #{tpu_custom_call.1} parent=1 // pred_region
      %s90 = ssub.s32 4096, 4096
      %91 = vsyncadd [#allocation10], %s90
      %s92 = sshll.u32 [#allocation11], 4
      %s93 = int_to_ptr.vmem [resolvable:$true] %s92
      %98 = dma.hbm_to_vmem [thread:$0]  %s11, 4096, %s93, [#allocation10], 256, 256, 16
    $region49: #{tpu_custom_call.1} parent=1 // pred_fallthru
      _
    // Predicated region
    $region50: #{tpu_custom_call.1} parent=1 // pred_check
      _
    $region51: #{tpu_custom_call.1} parent=1 // pred_check_branch
      %100 = sbr.rel (0) target = $region53
    $region52: #{tpu_custom_call.1} parent=1 // pred_region
      %s102 = ssub.s32 4096, 4096
      %103 = vsyncadd [#allocation13], %s102
      %s104 = sshll.u32 [#allocation12], 4
      %s105 = int_to_ptr.vmem [resolvable:$true] %s104
      %110 = dma.hbm_to_vmem [thread:$0]  %s12, 4096, %s105, [#allocation13], 256, 256, 16
    $region53: #{tpu_custom_call.1} parent=1 // pred_fallthru
      _
    // Predicated region
    $region54: #{tpu_custom_call.1} parent=1 // pred_check
      _
    $region55: #{tpu_custom_call.1} parent=1 // pred_check_branch
      %112 = sbr.rel (0) target = $region57
    $region56: #{tpu_custom_call.1} parent=1 // pred_region
      _
    $region57: #{tpu_custom_call.1} parent=1 // pred_fallthru
      _
    // Predicated region
    $region58: #{tpu_custom_call.1} parent=1 // pred_check
      _
    $region59: #{tpu_custom_call.1} parent=1 // pred_check_branch
      %114 = sbr.rel (0) target = $region61
    $region60: #{tpu_custom_call.1} parent=1 // pred_region
      %s116 = ssub.s32 8192, 8192
      %117 = vsyncadd [#allocation13], %s116
      %s118 = sshll.u32 [#allocation14], 4
      %s119 = int_to_ptr.vmem [resolvable:$true] %s118
      %124 = dma.hbm_to_vmem [thread:$0]  %s14, 8192, %s119, [#allocation13], 256, 256, 16
    $region61: #{tpu_custom_call.1} parent=1 // pred_fallthru
      _
    // Predicated region
    $region62: #{tpu_custom_call.1} parent=1 // pred_check
      _
    $region63: #{tpu_custom_call.1} parent=1 // pred_check_branch
      %126 = sbr.rel (0) target = $region65
    $region64: #{tpu_custom_call.1} parent=1 // pred_region
      _
    $region65: #{tpu_custom_call.1} parent=1 // pred_fallthru
      _
    // Predicated region
    $region66: #{tpu_custom_call.1} parent=1 // pred_check
      _
    $region67: #{tpu_custom_call.1} parent=1 // pred_check_branch
      %128 = sbr.rel (0) target = $region69
    $region68: #{tpu_custom_call.1} parent=1 // pred_region
      %s130 = ssub.s32 4096, 4096
      %131 = vsyncadd [#allocation16], %s130
      %s132 = sshll.u32 [#allocation15], 4
      %s133 = int_to_ptr.vmem [resolvable:$true] %s132
      %138 = dma.hbm_to_vmem [thread:$0]  %s16, 4096, %s133, [#allocation16], 128, 128, 8
    $region69: #{tpu_custom_call.1} parent=1 // pred_fallthru
      _
    // Predicated region
    $region70: #{tpu_custom_call.1} parent=1 // pred_check
      _
    $region71: #{tpu_custom_call.1} parent=1 // pred_check_branch
      %140 = sbr.rel (0) target = $region73
    $region72: #{tpu_custom_call.1} parent=1 // pred_region
      _
    $region73: #{tpu_custom_call.1} parent=1 // pred_fallthru
      _
    // Predicated region
    $region74: #{tpu_custom_call.1} parent=1 // pred_check
      _
    $region75: #{tpu_custom_call.1} parent=1 // pred_check_branch
      %142 = sbr.rel (0) target = $region77
    $region76: #{tpu_custom_call.1} parent=1 // pred_region
      %143 = dma.done [#allocation4], 128
    $region77: #{tpu_custom_call.1} parent=1 // pred_fallthru
      _
    // Predicated region
    $region78: #{tpu_custom_call.1} parent=1 // pred_check
      _
    $region79: #{tpu_custom_call.1} parent=1 // pred_check_branch
      %145 = sbr.rel (0) target = $region81
    $region80: #{tpu_custom_call.1} parent=1 // pred_region
      %146 = dma.done [#allocation7], 2048
    $region81: #{tpu_custom_call.1} parent=1 // pred_fallthru
      _
    // Predicated region
    $region82: #{tpu_custom_call.1} parent=1 // pred_check
      _
    $region83: #{tpu_custom_call.1} parent=1 // pred_check_branch
      %148 = sbr.rel (0) target = $region85
    $region84: #{tpu_custom_call.1} parent=1 // pred_region
      %149 = dma.done [#allocation7], 128
    $region85: #{tpu_custom_call.1} parent=1 // pred_fallthru
      _
    // Predicated region
    $region86: #{tpu_custom_call.1} parent=1 // pred_check
      _
    $region87: #{tpu_custom_call.1} parent=1 // pred_check_branch
      %151 = sbr.rel (0) target = $region89
    $region88: #{tpu_custom_call.1} parent=1 // pred_region
      %152 = dma.done [#allocation10], 2048
    $region89: #{tpu_custom_call.1} parent=1 // pred_fallthru
      _
    // Predicated region
    $region90: #{tpu_custom_call.1} parent=1 // pred_check
      _
    $region91: #{tpu_custom_call.1} parent=1 // pred_check_branch
      %154 = sbr.rel (0) target = $region93
    $region92: #{tpu_custom_call.1} parent=1 // pred_region
      %155 = dma.done [#allocation10], 4096
    $region93: #{tpu_custom_call.1} parent=1 // pred_fallthru
      _
    // Predicated region
    $region94: #{tpu_custom_call.1} parent=1 // pred_check
      _
    $region95: #{tpu_custom_call.1} parent=1 // pred_check_branch
      %157 = sbr.rel (0) target = $region97
    $region96: #{tpu_custom_call.1} parent=1 // pred_region
      %158 = dma.done [#allocation13], 4096
    $region97: #{tpu_custom_call.1} parent=1 // pred_fallthru
      _
    // Predicated region
    $region98: #{tpu_custom_call.1} parent=1 // pred_check
      _
    $region99: #{tpu_custom_call.1} parent=1 // pred_check_branch
      %160 = sbr.rel (0) target = $region101
    $region100: #{tpu_custom_call.1} parent=1 // pred_region
      %161 = dma.done [#allocation13], 8192
    $region101: #{tpu_custom_call.1} parent=1 // pred_fallthru
      _
    // Predicated region
    $region102: #{tpu_custom_call.1} parent=1 // pred_check
      _
    $region103: #{tpu_custom_call.1} parent=1 // pred_check_branch
      %163 = sbr.rel (0) target = $region105
    $region104: #{tpu_custom_call.1} parent=1 // pred_region
      %164 = dma.done [#allocation16], 4096
    $region105: #{tpu_custom_call.1} parent=1 // pred_fallthru
      _
    %p165 = scmp.eq.s32.totalorder 0, 0
    // Predicated region
    $region106: #{tpu_custom_call.1} parent=1 // pred_check
      %p166 = pneg %p165
    $region107: #{tpu_custom_call.1} parent=1 // pred_check_branch
      %168 = sbr.rel (%p166) target = $region109
    $region108: #{tpu_custom_call.1} parent=1 // pred_region
      %169 = vst [vmem:[#allocation2] sm:$0xff] 0.0
    $region109: #{tpu_custom_call.1} parent=1 // pred_fallthru
      _
    %v170 = vld [vmem:[#allocation2] sm:$0xff]
    %v171 = vld [vmem:[#allocation3] sm:$0xff]
    %v172 = vld [vmem:[#allocation6] sm:$0xff]
    %v173 = vld [vmem:[#allocation6 + $0x8] sm:$0xff]
    %v174 = vld [vmem:[#allocation6 + $0x10] sm:$0xff]
    %v175 = vld [vmem:[#allocation6 + $0x18] sm:$0xff]
    %v176 = vld [vmem:[#allocation6 + $0x20] sm:$0xff]
    %v177 = vld [vmem:[#allocation6 + $0x28] sm:$0xff]
    %v178 = vld [vmem:[#allocation6 + $0x30] sm:$0xff]
    %v179 = vld [vmem:[#allocation6 + $0x38] sm:$0xff]
    %v180 = vld [vmem:[#allocation6 + $0x40] sm:$0xff]
    %v181 = vld [vmem:[#allocation6 + $0x48] sm:$0xff]
    %v182 = vld [vmem:[#allocation6 + $0x50] sm:$0xff]
    %v183 = vld [vmem:[#allocation6 + $0x58] sm:$0xff]
    %v184 = vld [vmem:[#allocation6 + $0x60] sm:$0xff]
    %v185 = vld [vmem:[#allocation6 + $0x68] sm:$0xff]
    %v186 = vld [vmem:[#allocation6 + $0x70] sm:$0xff]
    %v187 = vld [vmem:[#allocation6 + $0x78] sm:$0xff]
    %188 = vmatprep.subr.mxu0 0.0
    %189 = vmatpush1.msra.mxu0 %v172
    %190 = vmatprep.subr.mxu0 0.0
    %191 = vmatpush1.msra.mxu0 %v173
    %192 = vmatprep.subr.mxu0 0.0
    %193 = vmatpush1.msra.mxu0 %v174
    %194 = vmatprep.subr.mxu0 0.0
    %195 = vmatpush1.msra.mxu0 %v175
    %196 = vmatprep.subr.mxu0 0.0
    %197 = vmatpush1.msra.mxu0 %v176
    %198 = vmatprep.subr.mxu0 0.0
    %199 = vmatpush1.msra.mxu0 %v177
    %200 = vmatprep.subr.mxu0 0.0
    %201 = vmatpush1.msra.mxu0 %v178
    %202 = vmatprep.subr.mxu0 0.0
    %203 = vmatpush1.msra.mxu0 %v179
    %204 = vmatprep.subr.mxu0 0.0
    %205 = vmatpush1.msra.mxu0 %v180
    %206 = vmatprep.subr.mxu0 0.0
    %207 = vmatpush1.msra.mxu0 %v181
    %208 = vmatprep.subr.mxu0 0.0
    %209 = vmatpush1.msra.mxu0 %v182
    %210 = vmatprep.subr.mxu0 0.0
    %211 = vmatpush1.msra.mxu0 %v183
    %212 = vmatprep.subr.mxu0 0.0
    %213 = vmatpush1.msra.mxu0 %v184
    %214 = vmatprep.subr.mxu0 0.0
    %215 = vmatpush1.msra.mxu0 %v185
    %216 = vmatprep.subr.mxu0 0.0
    %217 = vmatpush1.msra.mxu0 %v186
    %218 = vmatprep.subr.mxu0 0.0
    %219 = vmatpush1.msra.mxu0 %v187
    %220 = vmatprep.subr.mxu0 0.0
    %221 = vmatpush1.msra.mxu0 0.0
    %222 = vmatprep.subr.mxu0 0.0
    %223 = vmatpush1.msra.mxu0 0.0
    %224 = vmatprep.subr.mxu0 0.0
    %225 = vmatpush1.msra.mxu0 0.0
    %226 = vmatprep.subr.mxu0 0.0
    %227 = vmatpush1.msra.mxu0 0.0
    %228 = vmatprep.subr.mxu0 0.0
    %229 = vmatpush1.msra.mxu0 0.0
    %230 = vmatprep.subr.mxu0 0.0
    %231 = vmatpush1.msra.mxu0 0.0
    %232 = vmatprep.subr.mxu0 0.0
    %233 = vmatpush1.msra.mxu0 0.0
    %234 = vmatprep.subr.mxu0 0.0
    %235 = vmatpush1.msra.mxu0 0.0
    %236 = vmatprep.subr.mxu0 0.0
    %237 = vmatpush1.msra.mxu0 0.0
    %238 = vmatprep.subr.mxu0 0.0
    %239 = vmatpush1.msra.mxu0 0.0
    %240 = vmatprep.subr.mxu0 0.0
    %241 = vmatpush1.msra.mxu0 0.0
    %242 = vmatprep.subr.mxu0 0.0
    %243 = vmatpush1.msra.mxu0 0.0
    %244 = vmatprep.subr.mxu0 0.0
    %245 = vmatpush1.msra.mxu0 0.0
    %246 = vmatprep.subr.mxu0 0.0
    %247 = vmatpush1.msra.mxu0 0.0
    %248 = vmatprep.subr.mxu0 0.0
    %249 = vmatpush1.msra.mxu0 0.0
    %250 = vmatprep.subr.mxu0 0.0
    %251 = vmatpush1.msra.mxu0 0.0
    %252 = vmatprep.mubr.f32.mxu0 0.0
    %253 = vmatmul.mubr.f32.gmra.mrb[0].mxu0 %v171
    %v254 = vpop.f32.mrb[0].mxu0
    %v255 = vadd.f32 0.0, %v254
    %v256 = vpop.f32.mrb[0].mxu0
    %257 = vdwg.mxu0
    %v258 = vadd.f32 %v170, %v255
    %259 = vst [vmem:[#allocation2] sm:$0xff] %v258
    // Predicated region
    $region110: #{tpu_custom_call.1} parent=1 // pred_check
      %p260 = pneg %p165
    $region111: #{tpu_custom_call.1} parent=1 // pred_check_branch
      %262 = sbr.rel (%p260) target = $region113
    $region112: #{tpu_custom_call.1} parent=1 // pred_region
      %v263 = vld [vmem:[#allocation2] sm:$0xff]
      %v264 = vld [vmem:[%s4] sm:$0x1]
      %v266 = vlaneseq
      %v267 = vshrl.u32 %v266, 7
      %v268 = vsub.s32 0, %v267
      %v269 = vrot.slane %v264, %v268
      %v271 = vadd.f32 %v263, %v269
      %v272 = vld [vmem:[%s5] sm:$0x1]
      %v273 = vld [vmem:[%s6] sm:$0x1]
      %v274 = vlaneseq
      %v275 = vand.u32 %v274, 127
      %vm276 = vcmp.lt.s32.totalorder %v275, 32
      %v277 = vsel %vm276, %v271, 0.0
      %278 = vadd.xlane.f32.xlu0 %v277
      %v279 = vpop.xlane.xlu0 %278
      %v280 = vmul.f32 %v279, 0.03125
      %v281 = vsub.f32 %v271, %v280
      %v282 = vsel %vm276, %v281, 0.0
      %v283 = vmul.f32 %v282, %v282
      %284 = vadd.xlane.f32.xlu0 %v283
      %v285 = vpop.xlane.xlu0 %284
      %v286 = vmul.f32 %v285, 0.03125
      %v287 = vadd.f32 %v286, 1e-05
      %v288 = vrsqrt.pop %v287
      %v289 = vmul.f32 %v281, %v288
      %v291 = vlaneseq
      %v292 = vshrl.u32 %v291, 7
      %v293 = vsub.s32 0, %v292
      %v294 = vrot.slane %v272, %v293
      %v296 = vmul.f32 %v289, %v294
      %v298 = vlaneseq
      %v299 = vshrl.u32 %v298, 7
      %v300 = vsub.s32 0, %v299
      %v301 = vrot.slane %v273, %v300
      %v303 = vadd.f32 %v296, %v301
      %v304 = vtanh.pop %v303
      %v305 = vld [vmem:[#allocation8] sm:$0xff]
      %v306 = vld [vmem:[#allocation9] sm:$0xff]
      %v307 = vld [vmem:[#allocation9 + $0x8] sm:$0xff]
      %v308 = vld [vmem:[#allocation9 + $0x10] sm:$0xff]
      %v309 = vld [vmem:[#allocation9 + $0x18] sm:$0xff]
      %v310 = vld [vmem:[#allocation9 + $0x20] sm:$0xff]
      %v311 = vld [vmem:[#allocation9 + $0x28] sm:$0xff]
      %v312 = vld [vmem:[#allocation9 + $0x30] sm:$0xff]
      %v313 = vld [vmem:[#allocation9 + $0x38] sm:$0xff]
      %v314 = vld [vmem:[#allocation9 + $0x40] sm:$0xff]
      %v315 = vld [vmem:[#allocation9 + $0x48] sm:$0xff]
      %v316 = vld [vmem:[#allocation9 + $0x50] sm:$0xff]
      %v317 = vld [vmem:[#allocation9 + $0x58] sm:$0xff]
      %v318 = vld [vmem:[#allocation9 + $0x60] sm:$0xff]
      %v319 = vld [vmem:[#allocation9 + $0x68] sm:$0xff]
      %v320 = vld [vmem:[#allocation9 + $0x70] sm:$0xff]
      %v321 = vld [vmem:[#allocation9 + $0x78] sm:$0xff]
      %v322 = vld [vmem:[%s8] sm:$0x1]
      %v324 = vlaneseq
      %v325 = vshrl.u32 %v324, 7
      %v326 = vsub.s32 0, %v325
      %v327 = vrot.slane %v322, %v326
      %329 = vmatprep.subr.mxu0 0.0
      %330 = vmatpush1.msra.mxu0 %v306
      %331 = vmatprep.subr.mxu0 0.0
      %332 = vmatpush1.msra.mxu0 %v307
      %333 = vmatprep.subr.mxu0 0.0
      %334 = vmatpush1.msra.mxu0 %v308
      %335 = vmatprep.subr.mxu0 0.0
      %336 = vmatpush1.msra.mxu0 %v309
      %337 = vmatprep.subr.mxu0 0.0
      %338 = vmatpush1.msra.mxu0 %v310
      %339 = vmatprep.subr.mxu0 0.0
      %340 = vmatpush1.msra.mxu0 %v311
      %341 = vmatprep.subr.mxu0 0.0
      %342 = vmatpush1.msra.mxu0 %v312
      %343 = vmatprep.subr.mxu0 0.0
      %344 = vmatpush1.msra.mxu0 %v313
      %345 = vmatprep.subr.mxu0 0.0
      %346 = vmatpush1.msra.mxu0 %v314
      %347 = vmatprep.subr.mxu0 0.0
      %348 = vmatpush1.msra.mxu0 %v315
      %349 = vmatprep.subr.mxu0 0.0
      %350 = vmatpush1.msra.mxu0 %v316
      %351 = vmatprep.subr.mxu0 0.0
      %352 = vmatpush1.msra.mxu0 %v317
      %353 = vmatprep.subr.mxu0 0.0
      %354 = vmatpush1.msra.mxu0 %v318
      %355 = vmatprep.subr.mxu0 0.0
      %356 = vmatpush1.msra.mxu0 %v319
      %357 = vmatprep.subr.mxu0 0.0
      %358 = vmatpush1.msra.mxu0 %v320
      %359 = vmatprep.subr.mxu0 0.0
      %360 = vmatpush1.msra.mxu0 %v321
      %361 = vmatprep.subr.mxu0 0.0
      %362 = vmatpush1.msra.mxu0 0.0
      %363 = vmatprep.subr.mxu0 0.0
      %364 = vmatpush1.msra.mxu0 0.0
      %365 = vmatprep.subr.mxu0 0.0
      %366 = vmatpush1.msra.mxu0 0.0
      %367 = vmatprep.subr.mxu0 0.0
      %368 = vmatpush1.msra.mxu0 0.0
      %369 = vmatprep.subr.mxu0 0.0
      %370 = vmatpush1.msra.mxu0 0.0
      %371 = vmatprep.subr.mxu0 0.0
      %372 = vmatpush1.msra.mxu0 0.0
      %373 = vmatprep.subr.mxu0 0.0
      %374 = vmatpush1.msra.mxu0 0.0
      %375 = vmatprep.subr.mxu0 0.0
      %376 = vmatpush1.msra.mxu0 0.0
      %377 = vmatprep.subr.mxu0 0.0
      %378 = vmatpush1.msra.mxu0 0.0
      %379 = vmatprep.subr.mxu0 0.0
      %380 = vmatpush1.msra.mxu0 0.0
      %381 = vmatprep.subr.mxu0 0.0
      %382 = vmatpush1.msra.mxu0 0.0
      %383 = vmatprep.subr.mxu0 0.0
      %384 = vmatpush1.msra.mxu0 0.0
      %385 = vmatprep.subr.mxu0 0.0
      %386 = vmatpush1.msra.mxu0 0.0
      %387 = vmatprep.subr.mxu0 0.0
      %388 = vmatpush1.msra.mxu0 0.0
      %389 = vmatprep.subr.mxu0 0.0
      %390 = vmatpush1.msra.mxu0 0.0
      %391 = vmatprep.subr.mxu0 0.0
      %392 = vmatpush1.msra.mxu0 0.0
      %393 = vmatprep.mubr.f32.mxu0 0.0
      %394 = vmatmul.mubr.f32.gmra.mrb[0].mxu0 %v305
      %v395 = vpop.f32.mrb[0].mxu0
      %v396 = vadd.f32 %v327, %v395
      %v397 = vpop.f32.mrb[0].mxu0
      %398 = vdwg.mxu0
      %v399 = vld [vmem:[%s9] sm:$0x1]
      %v400 = vld [vmem:[%s10] sm:$0x1]
      %v401 = vsel %vm276, %v396, 0.0
      %402 = vadd.xlane.f32.xlu0 %v401
      %v403 = vpop.xlane.xlu0 %402
      %v404 = vmul.f32 %v403, 0.03125
      %v405 = vsub.f32 %v396, %v404
      %v406 = vsel %vm276, %v405, 0.0
      %v407 = vmul.f32 %v406, %v406
      %408 = vadd.xlane.f32.xlu0 %v407
      %v409 = vpop.xlane.xlu0 %408
      %v410 = vmul.f32 %v409, 0.03125
      %v411 = vadd.f32 %v410, 1e-05
      %v412 = vrsqrt.pop %v411
      %v413 = vmul.f32 %v405, %v412
      %v415 = vlaneseq
      %v416 = vshrl.u32 %v415, 7
      %v417 = vsub.s32 0, %v416
      %v418 = vrot.slane %v399, %v417
      %v420 = vmul.f32 %v413, %v418
      %v422 = vlaneseq
      %v423 = vshrl.u32 %v422, 7
      %v424 = vsub.s32 0, %v423
      %v425 = vrot.slane %v400, %v424
      %v427 = vadd.f32 %v420, %v425
      %v428 = vtanh.pop %v427
      %v429 = vadd.f32 %v304, %v428
      %v430 = vld [vmem:[#allocation11] sm:$0xff]
      %v431 = vld [vmem:[#allocation11 + $0x8] sm:$0xff]
      %v432 = vld [vmem:[#allocation11 + $0x10] sm:$0xff]
      %v433 = vld [vmem:[#allocation11 + $0x18] sm:$0xff]
      %v434 = vld [vmem:[#allocation11 + $0x20] sm:$0xff]
      %v435 = vld [vmem:[#allocation11 + $0x28] sm:$0xff]
      %v436 = vld [vmem:[#allocation11 + $0x30] sm:$0xff]
      %v437 = vld [vmem:[#allocation11 + $0x38] sm:$0xff]
      %v438 = vld [vmem:[#allocation11 + $0x40] sm:$0xff]
      %v439 = vld [vmem:[#allocation11 + $0x48] sm:$0xff]
      %v440 = vld [vmem:[#allocation11 + $0x50] sm:$0xff]
      %v441 = vld [vmem:[#allocation11 + $0x58] sm:$0xff]
      %v442 = vld [vmem:[#allocation11 + $0x60] sm:$0xff]
      %v443 = vld [vmem:[#allocation11 + $0x68] sm:$0xff]
      %v444 = vld [vmem:[#allocation11 + $0x70] sm:$0xff]
      %v445 = vld [vmem:[#allocation11 + $0x78] sm:$0xff]
      %v446 = vld [vmem:[#allocation11 + $0x80] sm:$0xff]
      %v447 = vld [vmem:[#allocation11 + $0x88] sm:$0xff]
      %v448 = vld [vmem:[#allocation11 + $0x90] sm:$0xff]
      %v449 = vld [vmem:[#allocation11 + $0x98] sm:$0xff]
      %v450 = vld [vmem:[#allocation11 + $0xa0] sm:$0xff]
      %v451 = vld [vmem:[#allocation11 + $0xa8] sm:$0xff]
      %v452 = vld [vmem:[#allocation11 + $0xb0] sm:$0xff]
      %v453 = vld [vmem:[#allocation11 + $0xb8] sm:$0xff]
      %v454 = vld [vmem:[#allocation11 + $0xc0] sm:$0xff]
      %v455 = vld [vmem:[#allocation11 + $0xc8] sm:$0xff]
      %v456 = vld [vmem:[#allocation11 + $0xd0] sm:$0xff]
      %v457 = vld [vmem:[#allocation11 + $0xd8] sm:$0xff]
      %v458 = vld [vmem:[#allocation11 + $0xe0] sm:$0xff]
      %v459 = vld [vmem:[#allocation11 + $0xe8] sm:$0xff]
      %v460 = vld [vmem:[#allocation11 + $0xf0] sm:$0xff]
      %v461 = vld [vmem:[#allocation11 + $0xf8] sm:$0xff]
      %v462 = vld [vmem:[%s3] sm:$0xff]
      %v463 = vld [vmem:[#allocation12] sm:$0xff]
      %v464 = vld [vmem:[#allocation12 + $0x8] sm:$0xff]
      %v465 = vld [vmem:[#allocation12 + $0x10] sm:$0xff]
      %v466 = vld [vmem:[#allocation12 + $0x18] sm:$0xff]
      %v467 = vld [vmem:[#allocation12 + $0x20] sm:$0xff]
      %v468 = vld [vmem:[#allocation12 + $0x28] sm:$0xff]
      %v469 = vld [vmem:[#allocation12 + $0x30] sm:$0xff]
      %v470 = vld [vmem:[#allocation12 + $0x38] sm:$0xff]
      %v471 = vld [vmem:[#allocation12 + $0x40] sm:$0xff]
      %v472 = vld [vmem:[#allocation12 + $0x48] sm:$0xff]
      %v473 = vld [vmem:[#allocation12 + $0x50] sm:$0xff]
      %v474 = vld [vmem:[#allocation12 + $0x58] sm:$0xff]
      %v475 = vld [vmem:[#allocation12 + $0x60] sm:$0xff]
      %v476 = vld [vmem:[#allocation12 + $0x68] sm:$0xff]
      %v477 = vld [vmem:[#allocation12 + $0x70] sm:$0xff]
      %v478 = vld [vmem:[#allocation12 + $0x78] sm:$0xff]
      %v479 = vld [vmem:[#allocation12 + $0x80] sm:$0xff]
      %v480 = vld [vmem:[#allocation12 + $0x88] sm:$0xff]
      %v481 = vld [vmem:[#allocation12 + $0x90] sm:$0xff]
      %v482 = vld [vmem:[#allocation12 + $0x98] sm:$0xff]
      %v483 = vld [vmem:[#allocation12 + $0xa0] sm:$0xff]
      %v484 = vld [vmem:[#allocation12 + $0xa8] sm:$0xff]
      %v485 = vld [vmem:[#allocation12 + $0xb0] sm:$0xff]
      %v486 = vld [vmem:[#allocation12 + $0xb8] sm:$0xff]
      %v487 = vld [vmem:[#allocation12 + $0xc0] sm:$0xff]
      %v488 = vld [vmem:[#allocation12 + $0xc8] sm:$0xff]
      %v489 = vld [vmem:[#allocation12 + $0xd0] sm:$0xff]
      %v490 = vld [vmem:[#allocation12 + $0xd8] sm:$0xff]
      %v491 = vld [vmem:[#allocation12 + $0xe0] sm:$0xff]
      %v492 = vld [vmem:[#allocation12 + $0xe8] sm:$0xff]
      %v493 = vld [vmem:[#allocation12 + $0xf0] sm:$0xff]
      %v494 = vld [vmem:[#allocation12 + $0xf8] sm:$0xff]
      %495 = vmatprep.subr.mxu0 %v464
      %496 = vmatpush1.msra.mxu0 %v463
      %497 = vmatprep.subr.mxu0 %v466
      %498 = vmatpush1.msra.mxu0 %v465
      %499 = vmatprep.subr.mxu0 %v468
      %500 = vmatpush1.msra.mxu0 %v467
      %501 = vmatprep.subr.mxu0 %v470
      %502 = vmatpush1.msra.mxu0 %v469
      %503 = vmatprep.subr.mxu0 %v472
      %504 = vmatpush1.msra.mxu0 %v471
      %505 = vmatprep.subr.mxu0 %v474
      %506 = vmatpush1.msra.mxu0 %v473
      %507 = vmatprep.subr.mxu0 %v476
      %508 = vmatpush1.msra.mxu0 %v475
      %509 = vmatprep.subr.mxu0 %v478
      %510 = vmatpush1.msra.mxu0 %v477
      %511 = vmatprep.subr.mxu0 %v480
      %512 = vmatpush1.msra.mxu0 %v479
      %513 = vmatprep.subr.mxu0 %v482
      %514 = vmatpush1.msra.mxu0 %v481
      %515 = vmatprep.subr.mxu0 %v484
      %516 = vmatpush1.msra.mxu0 %v483
      %517 = vmatprep.subr.mxu0 %v486
      %518 = vmatpush1.msra.mxu0 %v485
      %519 = vmatprep.subr.mxu0 %v488
      %520 = vmatpush1.msra.mxu0 %v487
      %521 = vmatprep.subr.mxu0 %v490
      %522 = vmatpush1.msra.mxu0 %v489
      %523 = vmatprep.subr.mxu0 %v492
      %524 = vmatpush1.msra.mxu0 %v491
      %525 = vmatprep.subr.mxu0 %v494
      %526 = vmatpush1.msra.mxu0 %v493
      %527 = vmatprep.subr.mxu0 0.0
      %528 = vmatpush1.msra.mxu0 0.0
      %529 = vmatprep.subr.mxu0 0.0
      %530 = vmatpush1.msra.mxu0 0.0
      %531 = vmatprep.subr.mxu0 0.0
      %532 = vmatpush1.msra.mxu0 0.0
      %533 = vmatprep.subr.mxu0 0.0
      %534 = vmatpush1.msra.mxu0 0.0
      %535 = vmatprep.subr.mxu0 0.0
      %536 = vmatpush1.msra.mxu0 0.0
      %537 = vmatprep.subr.mxu0 0.0
      %538 = vmatpush1.msra.mxu0 0.0
      %539 = vmatprep.subr.mxu0 0.0
      %540 = vmatpush1.msra.mxu0 0.0
      %541 = vmatprep.subr.mxu0 0.0
      %542 = vmatpush1.msra.mxu0 0.0
      %543 = vmatprep.subr.mxu0 0.0
      %544 = vmatpush1.msra.mxu0 0.0
      %545 = vmatprep.subr.mxu0 0.0
      %546 = vmatpush1.msra.mxu0 0.0
      %547 = vmatprep.subr.mxu0 0.0
      %548 = vmatpush1.msra.mxu0 0.0
      %549 = vmatprep.subr.mxu0 0.0
      %550 = vmatpush1.msra.mxu0 0.0
      %551 = vmatprep.subr.mxu0 0.0
      %552 = vmatpush1.msra.mxu0 0.0
      %553 = vmatprep.subr.mxu0 0.0
      %554 = vmatpush1.msra.mxu0 0.0
      %555 = vmatprep.subr.mxu0 0.0
      %556 = vmatpush1.msra.mxu0 0.0
      %557 = vmatprep.subr.mxu0 0.0
      %558 = vmatpush1.msra.mxu0 0.0
      %559 = vmatprep.mubr.f32.mxu0 0.0
      %560 = vmatmul.mubr.f32.gmra.mrb[0].mxu0 %v462
      %v561 = vpop.f32.mrb[0].mxu0
      %v562 = vadd.f32 0.0, %v561
      %v563 = vpop.f32.mrb[0].mxu0
      %v564 = vadd.f32 0.0, %v563
      %565 = vdwg.mxu0
      %566 = vmatprep.subr.mxu0 %v431
      %567 = vmatpush1.msra.mxu0 %v430
      %568 = vmatprep.subr.mxu0 %v433
      %569 = vmatpush1.msra.mxu0 %v432
      %570 = vmatprep.subr.mxu0 %v435
      %571 = vmatpush1.msra.mxu0 %v434
      %572 = vmatprep.subr.mxu0 %v437
      %573 = vmatpush1.msra.mxu0 %v436
      %574 = vmatprep.subr.mxu0 %v439
      %575 = vmatpush1.msra.mxu0 %v438
      %576 = vmatprep.subr.mxu0 %v441
      %577 = vmatpush1.msra.mxu0 %v440
      %578 = vmatprep.subr.mxu0 %v443
      %579 = vmatpush1.msra.mxu0 %v442
      %580 = vmatprep.subr.mxu0 %v445
      %581 = vmatpush1.msra.mxu0 %v444
      %582 = vmatprep.subr.mxu0 %v447
      %583 = vmatpush1.msra.mxu0 %v446
      %584 = vmatprep.subr.mxu0 %v449
      %585 = vmatpush1.msra.mxu0 %v448
      %586 = vmatprep.subr.mxu0 %v451
      %587 = vmatpush1.msra.mxu0 %v450
      %588 = vmatprep.subr.mxu0 %v453
      %589 = vmatpush1.msra.mxu0 %v452
      %590 = vmatprep.subr.mxu0 %v455
      %591 = vmatpush1.msra.mxu0 %v454
      %592 = vmatprep.subr.mxu0 %v457
      %593 = vmatpush1.msra.mxu0 %v456
      %594 = vmatprep.subr.mxu0 %v459
      %595 = vmatpush1.msra.mxu0 %v458
      %596 = vmatprep.subr.mxu0 %v461
      %597 = vmatpush1.msra.mxu0 %v460
      %598 = vmatprep.subr.mxu0 0.0
      %599 = vmatpush1.msra.mxu0 0.0
      %600 = vmatprep.subr.mxu0 0.0
      %601 = vmatpush1.msra.mxu0 0.0
      %602 = vmatprep.subr.mxu0 0.0
      %603 = vmatpush1.msra.mxu0 0.0
      %604 = vmatprep.subr.mxu0 0.0
      %605 = vmatpush1.msra.mxu0 0.0
      %606 = vmatprep.subr.mxu0 0.0
      %607 = vmatpush1.msra.mxu0 0.0
      %608 = vmatprep.subr.mxu0 0.0
      %609 = vmatpush1.msra.mxu0 0.0
      %610 = vmatprep.subr.mxu0 0.0
      %611 = vmatpush1.msra.mxu0 0.0
      %612 = vmatprep.subr.mxu0 0.0
      %613 = vmatpush1.msra.mxu0 0.0
      %614 = vmatprep.subr.mxu0 0.0
      %615 = vmatpush1.msra.mxu0 0.0
      %616 = vmatprep.subr.mxu0 0.0
      %617 = vmatpush1.msra.mxu0 0.0
      %618 = vmatprep.subr.mxu0 0.0
      %619 = vmatpush1.msra.mxu0 0.0
      %620 = vmatprep.subr.mxu0 0.0
      %621 = vmatpush1.msra.mxu0 0.0
      %622 = vmatprep.subr.mxu0 0.0
      %623 = vmatpush1.msra.mxu0 0.0
      %624 = vmatprep.subr.mxu0 0.0
      %625 = vmatpush1.msra.mxu0 0.0
      %626 = vmatprep.subr.mxu0 0.0
      %627 = vmatpush1.msra.mxu0 0.0
      %628 = vmatprep.subr.mxu0 0.0
      %629 = vmatpush1.msra.mxu0 0.0
      %630 = vmatprep.mubr.f32.mxu0 0.0
      %631 = vmatmul.mubr.f32.gmra.mrb[0].mxu0 %v429
      %v632 = vpop.f32.mrb[0].mxu0
      %v633 = vadd.f32 %v562, %v632
      %v634 = vpop.f32.mrb[0].mxu0
      %v635 = vadd.f32 %v564, %v634
      %636 = vdwg.mxu0
      %v637 = vld [vmem:[%s13] sm:$0x3]
      %v639 = vlaneseq
      %v640 = vshrl.u32 %v639, 7
      %v641 = vsub.s32 0, %v640
      %v642 = vrot.slane %v637, %v641
      %v643 = vlaneseq
      %v644 = vshrl.u32 %v643, 7
      %v645 = vsub.s32 1, %v644
      %v646 = vrot.slane %v637, %v645
      %v649 = vadd.f32 %v633, %v642
      %v650 = vadd.f32 %v635, %v646
      %v651 = vmax.f32 %v649, 0.0
      %v652 = vmax.f32 %v650, 0.0
      %v653 = vld [vmem:[#allocation14] sm:$0xff]
      %v654 = vld [vmem:[#allocation14 + $0x8] sm:$0xff]
      %v655 = vld [vmem:[#allocation14 + $0x10] sm:$0xff]
      %v656 = vld [vmem:[#allocation14 + $0x18] sm:$0xff]
      %v657 = vld [vmem:[#allocation14 + $0x20] sm:$0xff]
      %v658 = vld [vmem:[#allocation14 + $0x28] sm:$0xff]
      %v659 = vld [vmem:[#allocation14 + $0x30] sm:$0xff]
      %v660 = vld [vmem:[#allocation14 + $0x38] sm:$0xff]
      %v661 = vld [vmem:[#allocation14 + $0x40] sm:$0xff]
      %v662 = vld [vmem:[#allocation14 + $0x48] sm:$0xff]
      %v663 = vld [vmem:[#allocation14 + $0x50] sm:$0xff]
      %v664 = vld [vmem:[#allocation14 + $0x58] sm:$0xff]
      %v665 = vld [vmem:[#allocation14 + $0x60] sm:$0xff]
      %v666 = vld [vmem:[#allocation14 + $0x68] sm:$0xff]
      %v667 = vld [vmem:[#allocation14 + $0x70] sm:$0xff]
      %v668 = vld [vmem:[#allocation14 + $0x78] sm:$0xff]
      %v669 = vld [vmem:[#allocation14 + $0x80] sm:$0xff]
      %v670 = vld [vmem:[#allocation14 + $0x88] sm:$0xff]
      %v671 = vld [vmem:[#allocation14 + $0x90] sm:$0xff]
      %v672 = vld [vmem:[#allocation14 + $0x98] sm:$0xff]
      %v673 = vld [vmem:[#allocation14 + $0xa0] sm:$0xff]
      %v674 = vld [vmem:[#allocation14 + $0xa8] sm:$0xff]
      %v675 = vld [vmem:[#allocation14 + $0xb0] sm:$0xff]
      %v676 = vld [vmem:[#allocation14 + $0xb8] sm:$0xff]
      %v677 = vld [vmem:[#allocation14 + $0xc0] sm:$0xff]
      %v678 = vld [vmem:[#allocation14 + $0xc8] sm:$0xff]
      %v679 = vld [vmem:[#allocation14 + $0xd0] sm:$0xff]
      %v680 = vld [vmem:[#allocation14 + $0xd8] sm:$0xff]
      %v681 = vld [vmem:[#allocation14 + $0xe0] sm:$0xff]
      %v682 = vld [vmem:[#allocation14 + $0xe8] sm:$0xff]
      %v683 = vld [vmem:[#allocation14 + $0xf0] sm:$0xff]
      %v684 = vld [vmem:[#allocation14 + $0xf8] sm:$0xff]
      %v685 = vld [vmem:[#allocation14 + $0x100] sm:$0xff]
      %v686 = vld [vmem:[#allocation14 + $0x108] sm:$0xff]
      %v687 = vld [vmem:[#allocation14 + $0x110] sm:$0xff]
      %v688 = vld [vmem:[#allocation14 + $0x118] sm:$0xff]
      %v689 = vld [vmem:[#allocation14 + $0x120] sm:$0xff]
      %v690 = vld [vmem:[#allocation14 + $0x128] sm:$0xff]
      %v691 = vld [vmem:[#allocation14 + $0x130] sm:$0xff]
      %v692 = vld [vmem:[#allocation14 + $0x138] sm:$0xff]
      %v693 = vld [vmem:[#allocation14 + $0x140] sm:$0xff]
      %v694 = vld [vmem:[#allocation14 + $0x148] sm:$0xff]
      %v695 = vld [vmem:[#allocation14 + $0x150] sm:$0xff]
      %v696 = vld [vmem:[#allocation14 + $0x158] sm:$0xff]
      %v697 = vld [vmem:[#allocation14 + $0x160] sm:$0xff]
      %v698 = vld [vmem:[#allocation14 + $0x168] sm:$0xff]
      %v699 = vld [vmem:[#allocation14 + $0x170] sm:$0xff]
      %v700 = vld [vmem:[#allocation14 + $0x178] sm:$0xff]
      %v701 = vld [vmem:[#allocation14 + $0x180] sm:$0xff]
      %v702 = vld [vmem:[#allocation14 + $0x188] sm:$0xff]
      %v703 = vld [vmem:[#allocation14 + $0x190] sm:$0xff]
      %v704 = vld [vmem:[#allocation14 + $0x198] sm:$0xff]
      %v705 = vld [vmem:[#allocation14 + $0x1a0] sm:$0xff]
      %v706 = vld [vmem:[#allocation14 + $0x1a8] sm:$0xff]
      %v707 = vld [vmem:[#allocation14 + $0x1b0] sm:$0xff]
      %v708 = vld [vmem:[#allocation14 + $0x1b8] sm:$0xff]
      %v709 = vld [vmem:[#allocation14 + $0x1c0] sm:$0xff]
      %v710 = vld [vmem:[#allocation14 + $0x1c8] sm:$0xff]
      %v711 = vld [vmem:[#allocation14 + $0x1d0] sm:$0xff]
      %v712 = vld [vmem:[#allocation14 + $0x1d8] sm:$0xff]
      %v713 = vld [vmem:[#allocation14 + $0x1e0] sm:$0xff]
      %v714 = vld [vmem:[#allocation14 + $0x1e8] sm:$0xff]
      %v715 = vld [vmem:[#allocation14 + $0x1f0] sm:$0xff]
      %v716 = vld [vmem:[#allocation14 + $0x1f8] sm:$0xff]
      %v717 = vld [vmem:[%s15] sm:$0x3]
      %v719 = vlaneseq
      %v720 = vshrl.u32 %v719, 7
      %v721 = vsub.s32 0, %v720
      %v722 = vrot.slane %v717, %v721
      %v723 = vlaneseq
      %v724 = vshrl.u32 %v723, 7
      %v725 = vsub.s32 1, %v724
      %v726 = vrot.slane %v717, %v725
      %729 = vmatprep.subr.mxu0 %v654
      %730 = vmatpush1.msra.mxu0 %v653
      %731 = vmatprep.subr.mxu0 %v656
      %732 = vmatpush1.msra.mxu0 %v655
      %733 = vmatprep.subr.mxu0 %v658
      %734 = vmatpush1.msra.mxu0 %v657
      %735 = vmatprep.subr.mxu0 %v660
      %736 = vmatpush1.msra.mxu0 %v659
      %737 = vmatprep.subr.mxu0 %v662
      %738 = vmatpush1.msra.mxu0 %v661
      %739 = vmatprep.subr.mxu0 %v664
      %740 = vmatpush1.msra.mxu0 %v663
      %741 = vmatprep.subr.mxu0 %v666
      %742 = vmatpush1.msra.mxu0 %v665
      %743 = vmatprep.subr.mxu0 %v668
      %744 = vmatpush1.msra.mxu0 %v667
      %745 = vmatprep.subr.mxu0 %v670
      %746 = vmatpush1.msra.mxu0 %v669
      %747 = vmatprep.subr.mxu0 %v672
      %748 = vmatpush1.msra.mxu0 %v671
      %749 = vmatprep.subr.mxu0 %v674
      %750 = vmatpush1.msra.mxu0 %v673
      %751 = vmatprep.subr.mxu0 %v676
      %752 = vmatpush1.msra.mxu0 %v675
      %753 = vmatprep.subr.mxu0 %v678
      %754 = vmatpush1.msra.mxu0 %v677
      %755 = vmatprep.subr.mxu0 %v680
      %756 = vmatpush1.msra.mxu0 %v679
      %757 = vmatprep.subr.mxu0 %v682
      %758 = vmatpush1.msra.mxu0 %v681
      %759 = vmatprep.subr.mxu0 %v684
      %760 = vmatpush1.msra.mxu0 %v683
      %761 = vmatprep.subr.mxu0 %v686
      %762 = vmatpush1.msra.mxu0 %v685
      %763 = vmatprep.subr.mxu0 %v688
      %764 = vmatpush1.msra.mxu0 %v687
      %765 = vmatprep.subr.mxu0 %v690
      %766 = vmatpush1.msra.mxu0 %v689
      %767 = vmatprep.subr.mxu0 %v692
      %768 = vmatpush1.msra.mxu0 %v691
      %769 = vmatprep.subr.mxu0 %v694
      %770 = vmatpush1.msra.mxu0 %v693
      %771 = vmatprep.subr.mxu0 %v696
      %772 = vmatpush1.msra.mxu0 %v695
      %773 = vmatprep.subr.mxu0 %v698
      %774 = vmatpush1.msra.mxu0 %v697
      %775 = vmatprep.subr.mxu0 %v700
      %776 = vmatpush1.msra.mxu0 %v699
      %777 = vmatprep.subr.mxu0 %v702
      %778 = vmatpush1.msra.mxu0 %v701
      %779 = vmatprep.subr.mxu0 %v704
      %780 = vmatpush1.msra.mxu0 %v703
      %781 = vmatprep.subr.mxu0 %v706
      %782 = vmatpush1.msra.mxu0 %v705
      %783 = vmatprep.subr.mxu0 %v708
      %784 = vmatpush1.msra.mxu0 %v707
      %785 = vmatprep.subr.mxu0 %v710
      %786 = vmatpush1.msra.mxu0 %v709
      %787 = vmatprep.subr.mxu0 %v712
      %788 = vmatpush1.msra.mxu0 %v711
      %789 = vmatprep.subr.mxu0 %v714
      %790 = vmatpush1.msra.mxu0 %v713
      %791 = vmatprep.subr.mxu0 %v716
      %792 = vmatpush1.msra.mxu0 %v715
      %793 = vmatprep.mubr.f32.mxu0 %v652
      %794 = vmatmul.mubr.f32.gmra.mrb[0].mxu0 %v651
      %v795 = vpop.f32.mrb[0].mxu0
      %v796 = vadd.f32 %v722, %v795
      %v797 = vpop.f32.mrb[0].mxu0
      %v798 = vadd.f32 %v726, %v797
      %799 = vdwg.mxu0
      %v800 = vmax.f32 %v796, 0.0
      %v801 = vmax.f32 %v798, 0.0
      %v802 = vld [vmem:[#allocation15] sm:$0xff]
      %v803 = vld [vmem:[#allocation15 + $0x8] sm:$0xff]
      %v804 = vld [vmem:[#allocation15 + $0x10] sm:$0xff]
      %v805 = vld [vmem:[#allocation15 + $0x18] sm:$0xff]
      %v806 = vld [vmem:[#allocation15 + $0x20] sm:$0xff]
      %v807 = vld [vmem:[#allocation15 + $0x28] sm:$0xff]
      %v808 = vld [vmem:[#allocation15 + $0x30] sm:$0xff]
      %v809 = vld [vmem:[#allocation15 + $0x38] sm:$0xff]
      %v810 = vld [vmem:[#allocation15 + $0x40] sm:$0xff]
      %v811 = vld [vmem:[#allocation15 + $0x48] sm:$0xff]
      %v812 = vld [vmem:[#allocation15 + $0x50] sm:$0xff]
      %v813 = vld [vmem:[#allocation15 + $0x58] sm:$0xff]
      %v814 = vld [vmem:[#allocation15 + $0x60] sm:$0xff]
      %v815 = vld [vmem:[#allocation15 + $0x68] sm:$0xff]
      %v816 = vld [vmem:[#allocation15 + $0x70] sm:$0xff]
      %v817 = vld [vmem:[#allocation15 + $0x78] sm:$0xff]
      %v818 = vld [vmem:[#allocation15 + $0x80] sm:$0xff]
      %v819 = vld [vmem:[#allocation15 + $0x88] sm:$0xff]
      %v820 = vld [vmem:[#allocation15 + $0x90] sm:$0xff]
      %v821 = vld [vmem:[#allocation15 + $0x98] sm:$0xff]
      %v822 = vld [vmem:[#allocation15 + $0xa0] sm:$0xff]
      %v823 = vld [vmem:[#allocation15 + $0xa8] sm:$0xff]
      %v824 = vld [vmem:[#allocation15 + $0xb0] sm:$0xff]
      %v825 = vld [vmem:[#allocation15 + $0xb8] sm:$0xff]
      %v826 = vld [vmem:[#allocation15 + $0xc0] sm:$0xff]
      %v827 = vld [vmem:[#allocation15 + $0xc8] sm:$0xff]
      %v828 = vld [vmem:[#allocation15 + $0xd0] sm:$0xff]
      %v829 = vld [vmem:[#allocation15 + $0xd8] sm:$0xff]
      %v830 = vld [vmem:[#allocation15 + $0xe0] sm:$0xff]
      %v831 = vld [vmem:[#allocation15 + $0xe8] sm:$0xff]
      %v832 = vld [vmem:[#allocation15 + $0xf0] sm:$0xff]
      %v833 = vld [vmem:[#allocation15 + $0xf8] sm:$0xff]
      %v834 = vld [vmem:[%s17] sm:$0x1]
      %v836 = vlaneseq
      %v837 = vshrl.u32 %v836, 7
      %v838 = vsub.s32 0, %v837
      %v839 = vrot.slane %v834, %v838
      %841 = vmatprep.subr.mxu0 0.0
      %842 = vmatpush1.msra.mxu0 %v802
      %843 = vmatprep.subr.mxu0 0.0
      %844 = vmatpush1.msra.mxu0 %v803
      %845 = vmatprep.subr.mxu0 0.0
      %846 = vmatpush1.msra.mxu0 %v804
      %847 = vmatprep.subr.mxu0 0.0
      %848 = vmatpush1.msra.mxu0 %v805
      %849 = vmatprep.subr.mxu0 0.0
      %850 = vmatpush1.msra.mxu0 %v806
      %851 = vmatprep.subr.mxu0 0.0
      %852 = vmatpush1.msra.mxu0 %v807
      %853 = vmatprep.subr.mxu0 0.0
      %854 = vmatpush1.msra.mxu0 %v808
      %855 = vmatprep.subr.mxu0 0.0
      %856 = vmatpush1.msra.mxu0 %v809
      %857 = vmatprep.subr.mxu0 0.0
      %858 = vmatpush1.msra.mxu0 %v810
      %859 = vmatprep.subr.mxu0 0.0
      %860 = vmatpush1.msra.mxu0 %v811
      %861 = vmatprep.subr.mxu0 0.0
      %862 = vmatpush1.msra.mxu0 %v812
      %863 = vmatprep.subr.mxu0 0.0
      %864 = vmatpush1.msra.mxu0 %v813
      %865 = vmatprep.subr.mxu0 0.0
      %866 = vmatpush1.msra.mxu0 %v814
      %867 = vmatprep.subr.mxu0 0.0
      %868 = vmatpush1.msra.mxu0 %v815
      %869 = vmatprep.subr.mxu0 0.0
      %870 = vmatpush1.msra.mxu0 %v816
      %871 = vmatprep.subr.mxu0 0.0
      %872 = vmatpush1.msra.mxu0 %v817
      %873 = vmatprep.subr.mxu0 0.0
      %874 = vmatpush1.msra.mxu0 %v818
      %875 = vmatprep.subr.mxu0 0.0
      %876 = vmatpush1.msra.mxu0 %v819
      %877 = vmatprep.subr.mxu0 0.0
      %878 = vmatpush1.msra.mxu0 %v820
      %879 = vmatprep.subr.mxu0 0.0
      %880 = vmatpush1.msra.mxu0 %v821
      %881 = vmatprep.subr.mxu0 0.0
      %882 = vmatpush1.msra.mxu0 %v822
      %883 = vmatprep.subr.mxu0 0.0
      %884 = vmatpush1.msra.mxu0 %v823
      %885 = vmatprep.subr.mxu0 0.0
      %886 = vmatpush1.msra.mxu0 %v824
      %887 = vmatprep.subr.mxu0 0.0
      %888 = vmatpush1.msra.mxu0 %v825
      %889 = vmatprep.subr.mxu0 0.0
      %890 = vmatpush1.msra.mxu0 %v826
      %891 = vmatprep.subr.mxu0 0.0
      %892 = vmatpush1.msra.mxu0 %v827
      %893 = vmatprep.subr.mxu0 0.0
      %894 = vmatpush1.msra.mxu0 %v828
      %895 = vmatprep.subr.mxu0 0.0
      %896 = vmatpush1.msra.mxu0 %v829
      %897 = vmatprep.subr.mxu0 0.0
      %898 = vmatpush1.msra.mxu0 %v830
      %899 = vmatprep.subr.mxu0 0.0
      %900 = vmatpush1.msra.mxu0 %v831
      %901 = vmatprep.subr.mxu0 0.0
      %902 = vmatpush1.msra.mxu0 %v832
      %903 = vmatprep.subr.mxu0 0.0
      %904 = vmatpush1.msra.mxu0 %v833
      %905 = vmatprep.mubr.f32.mxu0 %v801
      %906 = vmatmul.mubr.f32.gmra.mrb[0].mxu0 %v800
      %v907 = vpop.f32.mrb[0].mxu0
      %v908 = vadd.f32 %v839, %v907
      %v909 = vpop.f32.mrb[0].mxu0
      %910 = vdwg.mxu0
      %911 = vst [vmem:[#allocation17] sm:$0xff] %v908
    $region113: #{tpu_custom_call.1} parent=1 // pred_fallthru
      _
    // Predicated region
    $region114: #{tpu_custom_call.1} parent=1 // pred_check
      _
    $region115: #{tpu_custom_call.1} parent=1 // pred_check_branch
      %913 = sbr.rel (0) target = $region117
    $region116: #{tpu_custom_call.1} parent=1 // pred_region
      %s915 = ssub.s32 128, 128
      %916 = vsyncadd [#allocation5], %s915
      %s918 = sshll.u32 [#allocation17], 4
      %s919 = int_to_ptr.vmem [resolvable:$true] %s918
      %921 = dma.vmem_to_hbm [thread:$0]  %s919, 128, %s18, [#allocation5]
    $region117: #{tpu_custom_call.1} parent=1 // pred_fallthru
      _
    // Predicated region
    $region118: #{tpu_custom_call.1} parent=1 // pred_check
      _
    $region119: #{tpu_custom_call.1} parent=1 // pred_check_branch
      %923 = sbr.rel (0) target = $region121
    $region120: #{tpu_custom_call.1} parent=1 // pred_region
      %924 = dma.done [#allocation5], 128
    $region121: #{tpu_custom_call.1} parent=1 // pred_fallthru
      _
    %925 = vsyncpa [#allocation4], 1
    %926 = vsyncpa [#allocation7], 1
    %927 = vsyncpa [#allocation10], 1
    %928 = vsyncpa [#allocation13], 1
    %929 = vsyncpa [#allocation16], 1
    %930 = vsyncpa [#allocation5], 1

</llo_original>
